<compile_context>
chip_gen: v7x
topology: tpu7x:2x2x1
jax: 0.10.0
libtpu: 0.0.40
codegen_flags: <defaults>
</compile_context>

<pallas_src>
import jax
import jax.numpy as jnp
from jax.experimental import pallas as pl
from jax.experimental.pallas import tpu as pltpu

BN_EPS = 1e-5
N_CORES = 2  # v7x megacore split; runs as two serial grid steps on v5e/v6e


def mltop_kernel(x_ref, q1_ref, gamma_ref, beta_ref, q2_ref, s2_ref, o_ref):
    h_idx = pl.program_id(1)

    @pl.when(h_idx == 0)
    def _():
        o_ref[...] = jnp.zeros_like(o_ref)

    # fc1 partial tile: [B, F_in](bf16) @ [F_in, H_t](bf16 dequant of int8)
    # -> [B, H_t] f32. The per-hidden-column int8 scale and the fc1 bias are
    # intentionally NOT applied: both cancel exactly under the train-mode
    # batch-norm normalization below.
    x_bf = x_ref[...].astype(jnp.bfloat16)
    w1_bf = q1_ref[...].astype(jnp.bfloat16)
    h = jnp.dot(x_bf, w1_bf, preferred_element_type=jnp.float32)

    # Train-mode BatchNorm1d: per-feature batch mean / biased variance for
    # this hidden tile (reduction over the batch axis only -> no cross-tile
    # coupling along the hidden dimension).
    mean = jnp.mean(h, axis=0, keepdims=True)
    centered = h - mean
    var = jnp.mean(centered * centered, axis=0, keepdims=True)
    h = centered * (gamma_ref[...] * jax.lax.rsqrt(var + BN_EPS)) + beta_ref[...]

    # ReLU
    h = jnp.maximum(h, 0.0)

    # fc2 partial: [B, H_t](bf16) @ [H_t, F_out](bf16 dequant of int8),
    # per-output-channel scale folded into a tiny (B, F_out) multiply,
    # accumulated directly into the resident f32 output slab of this core.
    w2_bf = q2_ref[...].astype(jnp.bfloat16)
    partial = jnp.dot(h.astype(jnp.bfloat16), w2_bf,
                      preferred_element_type=jnp.float32) * s2_ref[...]
    o_ref[...] += partial[None, :, :]


def mltop_forward(x, q1, s1, b1, gamma, beta, q2, s2, b2, *, h_tile=512):
    # s1 cancels under BN normalization; b1 cancels under BN mean-centering.
    del s1, b1
    B, F_in = x.shape
    H = q1.shape[1]
    F_out = q2.shape[1]
    assert H % (N_CORES * h_tile) == 0
    n_h = H // (N_CORES * h_tile)  # hidden tiles per core

    grid_spec = pltpu.PrefetchScalarGridSpec(
        num_scalar_prefetch=0,
        grid=(N_CORES, n_h),
        in_specs=[
            pl.BlockSpec((B, F_in), lambda c, h: (0, 0)),                 # x (resident)
            pl.BlockSpec((F_in, h_tile), lambda c, h: (0, c * n_h + h)),  # w1 int8 tile
            pl.BlockSpec((1, h_tile), lambda c, h: (0, c * n_h + h)),     # gamma tile
            pl.BlockSpec((1, h_tile), lambda c, h: (0, c * n_h + h)),     # beta tile
            pl.BlockSpec((h_tile, F_out), lambda c, h: (c * n_h + h, 0)), # w2 int8 tile
            pl.BlockSpec((1, F_out), lambda c, h: (0, 0)),                # w2 scale
        ],
        out_specs=pl.BlockSpec((1, B, F_out), lambda c, h: (c, 0, 0)),
    )

    partials = pl.pallas_call(
        mltop_kernel,
        out_shape=jax.ShapeDtypeStruct((N_CORES, B, F_out), jnp.float32),
        grid_spec=grid_spec,
        compiler_params=pltpu.CompilerParams(
            dimension_semantics=("parallel", "arbitrary"),  # cores x reduction
            vmem_limit_bytes=32 * 1024 * 1024,              # valid on v5e/v6e/v7x
        ),
    )(x, q1, gamma, beta, q2, s2)

    # Combine the two per-core partial slabs and add the fc2 bias in a single
    # fused XLA elementwise op.
    return jnp.sum(partials, axis=0) + b2


def _quantize_per_output_channel(w):
    """Symmetric int8 quantization with one scale per output column of w."""
    absmax = jnp.max(jnp.abs(w), axis=0, keepdims=True)
    scale = jnp.maximum(absmax, 1e-30) / 127.0
    q = jnp.round(w / scale).astype(jnp.int8)
    return q, scale.astype(jnp.float32)


def init_params(key, n_features_in=2048, hidden=1024, n_features_out=512):
    k1, k2, k3 = jax.random.split(key, 3)
    # nn.Linear + kaiming_normal_(a=0, mode='fan_out') -> std = sqrt(2/fan_out)
    std1 = (2.0 / hidden) ** 0.5
    std2 = (2.0 / n_features_out) ** 0.5
    w1_t = std1 * jax.random.normal(k1, (n_features_in, hidden), jnp.float32)
    w2_t = std2 * jax.random.normal(k2, (hidden, n_features_out), jnp.float32)
    # Weights stored pre-transposed [F_in, F_out], int8 + per-column f32 scale.
    q1, s1 = _quantize_per_output_channel(w1_t)
    q2, s2 = _quantize_per_output_channel(w2_t)
    b1 = jnp.zeros((1, hidden), jnp.float32)
    b2 = jnp.zeros((1, n_features_out), jnp.float32)
    # BatchNorm1d: weight ~ N(1, 0.02), bias = 0
    gamma = 1.0 + 0.02 * jax.random.normal(k3, (1, hidden), jnp.float32)
    beta = jnp.zeros((1, hidden), jnp.float32)
    return q1, s1, b1, gamma, beta, q2, s2, b2


def mltop_reference(x, q1, s1, b1, gamma, beta, q2, s2, b2):
    # Pure-JAX reference mirroring the kernel's dtype/quantization plan
    # (int8 weights dequantized, bf16 MXU inputs, f32 accumulation). It applies
    # s1 and b1 explicitly; they cancel through train-mode BN, matching the
    # kernel which skips them.
    x_bf = x.astype(jnp.bfloat16)
    h = jnp.dot(x_bf, q1.astype(jnp.bfloat16),
                preferred_element_type=jnp.float32) * s1 + b1
    mean = jnp.mean(h, axis=0, keepdims=True)
    var = jnp.mean((h - mean) ** 2, axis=0, keepdims=True)
    h = (h - mean) * jax.lax.rsqrt(var + BN_EPS) * gamma + beta
    h = jnp.maximum(h, 0.0)
    return jnp.dot(h.astype(jnp.bfloat16), q2.astype(jnp.bfloat16),
                   preferred_element_type=jnp.float32) * s2 + b2


if __name__ == "__main__":
    key = jax.random.PRNGKey(0)
    kx, kp = jax.random.split(key)

    B = 8  # small batch; BN train mode needs B >= 2
    n_features_in, hidden, n_features_out = 2048, 1024, 512

    x = jax.random.normal(kx, (B, n_features_in), jnp.float32)
    params = init_params(kp, n_features_in, hidden, n_features_out)

    out = mltop_forward(x, *params)
    out = jax.block_until_ready(out)

    ref = mltop_reference(x, *params)
    assert out.shape == (B, n_features_out)
    assert out.dtype == jnp.float32
    assert jnp.allclose(out, ref, atol=1e-2, rtol=1e-2), float(
        jnp.max(jnp.abs(out - ref)))

    print("KERNEL_OK")
</pallas_src>

<mosaic_0001>
module attributes {stable_mosaic.version = 11 : i64} {
  func.func @mltop_kernel(%arg0: i32, %arg1: i32, %arg2: memref<8x2048xf32, #tpu.memory_space<vmem>>, %arg3: memref<2048x512xi8, #tpu.memory_space<vmem>>, %arg4: memref<1x512xf32, #tpu.memory_space<vmem>>, %arg5: memref<1x512xf32, #tpu.memory_space<vmem>>, %arg6: memref<512x512xi8, #tpu.memory_space<vmem>>, %arg7: memref<1x512xf32, #tpu.memory_space<vmem>>, %arg8: memref<1x8x512xf32, #tpu.memory_space<vmem>>) attributes {dimension_semantics = [#tpu.dimension_semantics<parallel>, #tpu.dimension_semantics<arbitrary>], iteration_bounds = array<i64: 2, 1>, scalar_prefetch = 0 : i64, scratch_operands = 0 : i64, tpu.core_type = #tpu.core_type<tc>, window_params = [{pipeline_mode = #tpu.pipeline_mode<synchronous>, transform_indices = @transform_0, window_bounds = array<i64: 8, 2048>}, {transform_indices = @transform_1, window_bounds = array<i64: 2048, 512>}, {transform_indices = @transform_2, window_bounds = array<i64: 1, 512>}, {transform_indices = @transform_3, window_bounds = array<i64: 1, 512>}, {transform_indices = @transform_4, window_bounds = array<i64: 512, 512>}, {pipeline_mode = #tpu.pipeline_mode<synchronous>, transform_indices = @transform_5, window_bounds = array<i64: 1, 512>}, {transform_indices = @transform_6, window_bounds = array<i64: 1, 8, 512>}]} {
    %c0_i32 = arith.constant 0 : i32
    %0 = arith.cmpi eq, %arg1, %c0_i32 : i32
    %1 = arith.extui %0 : i1 to i32
    %c0_i32_0 = arith.constant 0 : i32
    %2 = arith.cmpi ne, %1, %c0_i32_0 : i32
    scf.if %2 {
      %cst_25 = arith.constant 0.000000e+00 : f32
      %42 = vector.broadcast %cst_25 : f32 to vector<1x8x512xf32>
      %c0_26 = arith.constant 0 : index
      %c0_27 = arith.constant 0 : index
      %c0_28 = arith.constant 0 : index
      %43 = vector.load %arg8[%c0_26, %c0_27, %c0_28] : memref<1x8x512xf32, #tpu.memory_space<vmem>>, vector<1x8x512xf32>
      tpu.vector_store %arg8[%c0_26, %c0_27, %c0_28], %42 {strides = array<i32>} : memref<1x8x512xf32, #tpu.memory_space<vmem>>, vector<1x8x512xf32>,
    } else {
    }
    %c0 = arith.constant 0 : index
    %c0_1 = arith.constant 0 : index
    %3 = vector.load %arg2[%c0, %c0_1] : memref<8x2048xf32, #tpu.memory_space<vmem>>, vector<8x2048xf32>
    %4 = arith.truncf %3 : vector<8x2048xf32> to vector<8x2048xbf16>
    %c0_2 = arith.constant 0 : index
    %c0_3 = arith.constant 0 : index
    %5 = vector.load %arg3[%c0_2, %c0_3] : memref<2048x512xi8, #tpu.memory_space<vmem>>, vector<2048x512xi8>
    %6 = arith.sitofp %5 : vector<2048x512xi8> to vector<2048x512xbf16>
    %cst = arith.constant dense<0.000000e+00> : vector<8x512xf32>
    %7 = tpu.matmul %4, %6, %cst {dimension_numbers = #tpu.dot_dimension_numbers<[1], [0], [0], [1], [0, 0, 1, 1], [], []>} : vector<8x2048xbf16>, vector<2048x512xbf16>, vector<8x512xf32> -> vector<8x512xf32>
    %cst_4 = arith.constant dense<0.000000e+00> : vector<512xf32>
    %8 = vector.multi_reduction <add>, %7, %cst_4 [0] : vector<8x512xf32> to vector<512xf32>
    %9 = vector.shape_cast %8 : vector<512xf32> to vector<1x512xf32>
    %cst_5 = arith.constant 8.000000e+00 : f32
    %10 = vector.broadcast %cst_5 : f32 to vector<1x512xf32>
    %11 = arith.divf %9, %10 : vector<1x512xf32>
    %12 = vector.broadcast %11 : vector<1x512xf32> to vector<8x512xf32>
    %13 = arith.subf %7, %12 : vector<8x512xf32>
    %14 = arith.mulf %13, %13 : vector<8x512xf32>
    %cst_6 = arith.constant dense<0.000000e+00> : vector<512xf32>
    %15 = vector.multi_reduction <add>, %14, %cst_6 [0] : vector<8x512xf32> to vector<512xf32>
    %16 = vector.shape_cast %15 : vector<512xf32> to vector<1x512xf32>
    %cst_7 = arith.constant 8.000000e+00 : f32
    %17 = vector.broadcast %cst_7 : f32 to vector<1x512xf32>
    %18 = arith.divf %16, %17 : vector<1x512xf32>
    %c0_8 = arith.constant 0 : index
    %c0_9 = arith.constant 0 : index
    %19 = vector.load %arg4[%c0_8, %c0_9] : memref<1x512xf32, #tpu.memory_space<vmem>>, vector<1x512xf32>
    %cst_10 = arith.constant 9.99999974E-6 : f32
    %20 = vector.broadcast %cst_10 : f32 to vector<1x512xf32>
    %21 = arith.addf %18, %20 : vector<1x512xf32>
    %22 = math.rsqrt %21 : vector<1x512xf32>
    %23 = arith.mulf %19, %22 : vector<1x512xf32>
    %24 = vector.broadcast %23 : vector<1x512xf32> to vector<8x512xf32>
    %25 = arith.mulf %13, %24 : vector<8x512xf32>
    %c0_11 = arith.constant 0 : index
    %c0_12 = arith.constant 0 : index
    %26 = vector.load %arg5[%c0_11, %c0_12] : memref<1x512xf32, #tpu.memory_space<vmem>>, vector<1x512xf32>
    %27 = vector.broadcast %26 : vector<1x512xf32> to vector<8x512xf32>
    %28 = arith.addf %25, %27 : vector<8x512xf32>
    %cst_13 = arith.constant 0.000000e+00 : f32
    %29 = vector.broadcast %cst_13 : f32 to vector<8x512xf32>
    %30 = arith.maximumf %28, %29 : vector<8x512xf32>
    %c0_14 = arith.constant 0 : index
    %c0_15 = arith.constant 0 : index
    %31 = vector.load %arg6[%c0_14, %c0_15] : memref<512x512xi8, #tpu.memory_space<vmem>>, vector<512x512xi8>
    %32 = arith.sitofp %31 : vector<512x512xi8> to vector<512x512xbf16>
    %33 = arith.truncf %30 : vector<8x512xf32> to vector<8x512xbf16>
    %cst_16 = arith.constant dense<0.000000e+00> : vector<8x512xf32>
    %34 = tpu.matmul %33, %32, %cst_16 {dimension_numbers = #tpu.dot_dimension_numbers<[1], [0], [0], [1], [0, 0, 1, 1], [], []>} : vector<8x512xbf16>, vector<512x512xbf16>, vector<8x512xf32> -> vector<8x512xf32>
    %c0_17 = arith.constant 0 : index
    %c0_18 = arith.constant 0 : index
    %35 = vector.load %arg7[%c0_17, %c0_18] : memref<1x512xf32, #tpu.memory_space<vmem>>, vector<1x512xf32>
    %36 = vector.broadcast %35 : vector<1x512xf32> to vector<8x512xf32>
    %37 = arith.mulf %34, %36 : vector<8x512xf32>
    %c0_19 = arith.constant 0 : index
    %c0_20 = arith.constant 0 : index
    %c0_21 = arith.constant 0 : index
    %38 = vector.load %arg8[%c0_19, %c0_20, %c0_21] : memref<1x8x512xf32, #tpu.memory_space<vmem>>, vector<1x8x512xf32>
    %39 = vector.shape_cast %37 : vector<8x512xf32> to vector<1x8x512xf32>
    %40 = arith.addf %38, %39 : vector<1x8x512xf32>
    %c0_22 = arith.constant 0 : index
    %c0_23 = arith.constant 0 : index
    %c0_24 = arith.constant 0 : index
    %41 = vector.load %arg8[%c0_22, %c0_23, %c0_24] : memref<1x8x512xf32, #tpu.memory_space<vmem>>, vector<1x8x512xf32>
    tpu.vector_store %arg8[%c0_22, %c0_23, %c0_24], %40 {strides = array<i32>} : memref<1x8x512xf32, #tpu.memory_space<vmem>>, vector<1x8x512xf32>,
    return
  }
  func.func @transform_0(%arg0: i32, %arg1: i32) -> (i32, i32) {
    %c0_i32 = arith.constant 0 : i32
    %c0_i32_0 = arith.constant 0 : i32
    %c0_i32_1 = arith.constant 0 : i32
    return %c0_i32, %c0_i32_0 : i32, i32
  }
  func.func @transform_1(%arg0: i32, %arg1: i32) -> (i32, i32) {
    %c1_i32 = arith.constant 1 : i32
    %0 = arith.muli %arg0, %c1_i32 : i32
    %1 = arith.addi %0, %arg1 : i32
    %c0_i32 = arith.constant 0 : i32
    %c0_i32_0 = arith.constant 0 : i32
    return %c0_i32, %1 : i32, i32
  }
  func.func @transform_2(%arg0: i32, %arg1: i32) -> (i32, i32) {
    %c1_i32 = arith.constant 1 : i32
    %0 = arith.muli %arg0, %c1_i32 : i32
    %1 = arith.addi %0, %arg1 : i32
    %c0_i32 = arith.constant 0 : i32
    %c0_i32_0 = arith.constant 0 : i32
    return %c0_i32, %1 : i32, i32
  }
  func.func @transform_3(%arg0: i32, %arg1: i32) -> (i32, i32) {
    %c1_i32 = arith.constant 1 : i32
    %0 = arith.muli %arg0, %c1_i32 : i32
    %1 = arith.addi %0, %arg1 : i32
    %c0_i32 = arith.constant 0 : i32
    %c0_i32_0 = arith.constant 0 : i32
    return %c0_i32, %1 : i32, i32
  }
  func.func @transform_4(%arg0: i32, %arg1: i32) -> (i32, i32) {
    %c1_i32 = arith.constant 1 : i32
    %0 = arith.muli %arg0, %c1_i32 : i32
    %1 = arith.addi %0, %arg1 : i32
    %c0_i32 = arith.constant 0 : i32
    %c0_i32_0 = arith.constant 0 : i32
    return %1, %c0_i32 : i32, i32
  }
  func.func @transform_5(%arg0: i32, %arg1: i32) -> (i32, i32) {
    %c0_i32 = arith.constant 0 : i32
    %c0_i32_0 = arith.constant 0 : i32
    %c0_i32_1 = arith.constant 0 : i32
    return %c0_i32, %c0_i32_0 : i32, i32
  }
  func.func @transform_6(%arg0: i32, %arg1: i32) -> (i32, i32, i32) {
    %c0_i32 = arith.constant 0 : i32
    %c0_i32_0 = arith.constant 0 : i32
    %c0_i32_1 = arith.constant 0 : i32
    return %arg0, %c0_i32, %c0_i32_0 : i32, i32, i32
  }
}

</mosaic_0001>

<llo_original>
// kernel: tpu_custom_call.1
$region0: #{tpu_custom_call.1}
  #allocation0 [shape = 'u32[]', space=smem, size = 0x4, offset = 0x4, fixed_abs, tag = 'smem constant byte address 0x4 - core index']
  #allocation1 [shape = 'u32[144,128]{1,0:T(1,128)}', space=vmem, size = 0x12000, scoped, tag = 'internal scratch']
  %s0 = inlined_call_operand.hbm [shape: f32[8,2048], index: 0, kind: input, shape index: {}]
  %s1 = inlined_call_operand.hbm [shape: s8[2048,1024], index: 1, kind: input, shape index: {}]
  %s2 = inlined_call_operand.hbm [shape: f32[1,1024], index: 2, kind: input, shape index: {}]
  %s3 = inlined_call_operand.hbm [shape: f32[1,1024], index: 3, kind: input, shape index: {}]
  %s4 = inlined_call_operand.hbm [shape: s8[1024,512], index: 4, kind: input, shape index: {}]
  %s5 = inlined_call_operand.hbm [shape: f32[1,512], index: 5, kind: input, shape index: {}]
  %s6 = inlined_call_operand.hbm [shape: f32[2,8,512], index: 6, kind: output, shape index: {}]
  %s7 = sld [smem:[#allocation0]]
  $region85: #{tpu_custom_call.1} parent=0
    _
  %s9 = ssub.s32 1, %s7
  %s10 = scalar_select 0, %s9, %s7
  $region1: #{tpu_custom_call.1} parent=0
    #allocation2 [shape = 'u8[65536]{0}', space=vmem, size = 0x10000, scoped, tag = 'input window, operand 0, single buffered']
    #allocation3 [shape = 's32[2]{0}', space=sflag, size = 0x8, scoped, tag = 'scoped memory for tpu_custom_call.1']
    #allocation4 [shape = 's32[2]{0}', space=sflag, size = 0x8, scoped, tag = 'scoped memory for tpu_custom_call.1']
    #allocation5 [shape = 'u8[2097152]{0}', space=vmem, size = 0x200000, scoped, tag = 'input window, operand 1']
    #allocation6 [shape = 's32[2]{0}', space=sflag, size = 0x8, scoped, tag = 'scoped memory for tpu_custom_call.1']
    #allocation7 [shape = 'u8[4096]{0}', space=vmem, size = 0x1000, scoped, tag = 'input window, operand 2']
    #allocation8 [shape = 'u8[4096]{0}', space=vmem, size = 0x1000, scoped, tag = 'input window, operand 3']
    #allocation9 [shape = 's32[2]{0}', space=sflag, size = 0x8, scoped, tag = 'scoped memory for tpu_custom_call.1']
    #allocation10 [shape = 'u8[524288]{0}', space=vmem, size = 0x80000, scoped, tag = 'input window, operand 4']
    #allocation11 [shape = 'u8[2048]{0}', space=vmem, size = 0x800, scoped, tag = 'input window, operand 5, single buffered']
    #allocation12 [shape = 's32[1]{0}', space=sflag, size = 0x4, scoped, tag = 'scoped memory for tpu_custom_call.1']
    #allocation13 [shape = 'u8[32768]{0}', space=vmem, size = 0x8000, scoped, tag = 'output window, operand 0']
    %11 = vsyncpa [#allocation3], 0
    %12 = vsyncpa [#allocation6], 0
    %s13 = scalar_lea.sflag [#allocation6], 1
    %14 = vsyncpa %s13, 0
    %15 = vsyncpa [#allocation9], 0
    %s16 = scalar_lea.sflag [#allocation9], 1
    %17 = vsyncpa %s16, 0
    %18 = vsyncpa [#allocation12], 0
    %19 = vsyncpa [#allocation4], 0
    %s20 = scalar_lea.sflag [#allocation4], 1
    %21 = vsyncpa %s20, 0
    loop: start=0, step=1, limit=4
    $region2: #{tpu_custom_call.1} parent=1 // loop_pre_header
      _
    $region3: #{tpu_custom_call.1} parent=1 // loop_header
      %s23 = sphi 0, %s27
      %p24 = scmp.ge.s32.totalorder %s23, 4
      %s30 = sphi 0, %s42
      %s31 = sphi 0, %s38
      %s32 = sphi 0, %s30
      %s33 = sphi 0, %s31
      %s34 = sphi 0, %s32
      %s35 = sphi 0, %s33
      %s43 = sphi 0, %s43
      %s45 = sphi 0, %s43
      %s46 = sphi 0, %s45
      %s60 = sphi 0, %s46
      %s68 = sphi 0, %s70
      %s71 = sphi 0, %s68
      %s72 = sphi 0, %s71
      %s88 = sphi 0, %s72
      %s96 = sphi 0, %s98
      %s99 = sphi 0, %s96
      %s100 = sphi 0, %s99
      %s116 = sphi 0, %s100
      %s124 = sphi 0, %s126
      %s127 = sphi 0, %s124
      %s128 = sphi 0, %s127
      %s144 = sphi 0, %s128
      %s152 = sphi 0, %s154
      %s155 = sphi 0, %s152
      %s156 = sphi 0, %s155
      %s172 = sphi 0, %s156
      %s176 = sphi 0, %s176
      %s178 = sphi 0, %s176
      %s179 = sphi 0, %s178
      %s193 = sphi 0, %s179
      %s199 = sphi 0, %s201
      %s202 = sphi 0, %s199
      %s203 = sphi 0, %s202
      %s219 = sphi 0, %s203
    $region4: #{tpu_custom_call.1} parent=1 // loop_header_branch
      %26 = sbr.rel (%p24) target = $region8
    $region5: #{tpu_custom_call.1} parent=1 // loop_body
      %s28 = ssub.s32 %s23, 1
      %s29 = ssub.s32 %s23, 2
      %s36 = sadd.s32 1, %s31
      %p37 = scmp.ge.s32.totalorder %s36, 1
      %s38 = scalar_select %p37, 0, %s36
      %s39 = sadd.s32 1, %s30
      %s40 = scalar_select %p37, %s39, %s30
      %p41 = scmp.ge.s32.totalorder %s40, 2
      %s42 = scalar_select %p41, 0, %s40
      %s44 = sadd.s32 %s43, 1
      %p47 = scmp.eq.s32.totalorder %s23, 1
      %p48 = scmp.ne.s32.totalorder %s43, %s45
      %p49 = scmp.eq.s32.totalorder %s23, 0
      %p50 = por %p48, %p49
      %p51 = scmp.ne.s32.totalorder %s43, %s45
      %p52 = scmp.eq.s32.totalorder %s28, 1
      %p53 = por %p51, %p52
      %p54 = scmp.ne.s32.totalorder %s45, %s46
      %p55 = scmp.eq.s32.totalorder %s28, 0
      %p56 = por %p54, %p55
      %p57 = scmp.ne.s32.totalorder %s45, %s46
      %p58 = scmp.eq.s32.totalorder %s29, 1
      %p59 = por %p57, %p58
      %p61 = scmp.ne.s32.totalorder %s46, %s60
      %p62 = scmp.eq.s32.totalorder %s29, 0
      %p63 = por %p61, %p62
      %s64 = sadd.s32 %s30, %s31
      %s65 = sadd.s32 %s42, %s38
      %s66 = ssub.s32 %s64, %s65
      %p67 = scmp.eq.s32.totalorder %s66, 0
      %s69 = sadd.s32 %s68, 1
      %s70 = scalar_select %p67, %s68, %s69
      %p73 = pneg %p67
      %p74 = scmp.eq.s32.totalorder %s23, 1
      %p75 = por %p73, %p74
      %p76 = scmp.ne.s32.totalorder %s68, %s71
      %p77 = scmp.eq.s32.totalorder %s23, 0
      %p78 = por %p76, %p77
      %p79 = scmp.ne.s32.totalorder %s68, %s71
      %p80 = scmp.eq.s32.totalorder %s28, 1
      %p81 = por %p79, %p80
      %p82 = scmp.ne.s32.totalorder %s71, %s72
      %p83 = scmp.eq.s32.totalorder %s28, 0
      %p84 = por %p82, %p83
      %p85 = scmp.ne.s32.totalorder %s71, %s72
      %p86 = scmp.eq.s32.totalorder %s29, 1
      %p87 = por %p85, %p86
      %p89 = scmp.ne.s32.totalorder %s72, %s88
      %p90 = scmp.eq.s32.totalorder %s29, 0
      %p91 = por %p89, %p90
      %s92 = sadd.s32 %s30, %s31
      %s93 = sadd.s32 %s42, %s38
      %s94 = ssub.s32 %s92, %s93
      %p95 = scmp.eq.s32.totalorder %s94, 0
      %s97 = sadd.s32 %s96, 1
      %s98 = scalar_select %p95, %s96, %s97
      %p101 = pneg %p95
      %p102 = scmp.eq.s32.totalorder %s23, 1
      %p103 = por %p101, %p102
      %p104 = scmp.ne.s32.totalorder %s96, %s99
      %p105 = scmp.eq.s32.totalorder %s23, 0
      %p106 = por %p104, %p105
      %p107 = scmp.ne.s32.totalorder %s96, %s99
      %p108 = scmp.eq.s32.totalorder %s28, 1
      %p109 = por %p107, %p108
      %p110 = scmp.ne.s32.totalorder %s99, %s100
      %p111 = scmp.eq.s32.totalorder %s28, 0
      %p112 = por %p110, %p111
      %p113 = scmp.ne.s32.totalorder %s99, %s100
      %p114 = scmp.eq.s32.totalorder %s29, 1
      %p115 = por %p113, %p114
      %p117 = scmp.ne.s32.totalorder %s100, %s116
      %p118 = scmp.eq.s32.totalorder %s29, 0
      %p119 = por %p117, %p118
      %s120 = sadd.s32 %s30, %s31
      %s121 = sadd.s32 %s42, %s38
      %s122 = ssub.s32 %s120, %s121
      %p123 = scmp.eq.s32.totalorder %s122, 0
      %s125 = sadd.s32 %s124, 1
      %s126 = scalar_select %p123, %s124, %s125
      %p129 = pneg %p123
      %p130 = scmp.eq.s32.totalorder %s23, 1
      %p131 = por %p129, %p130
      %p132 = scmp.ne.s32.totalorder %s124, %s127
      %p133 = scmp.eq.s32.totalorder %s23, 0
      %p134 = por %p132, %p133
      %p135 = scmp.ne.s32.totalorder %s124, %s127
      %p136 = scmp.eq.s32.totalorder %s28, 1
      %p137 = por %p135, %p136
      %p138 = scmp.ne.s32.totalorder %s127, %s128
      %p139 = scmp.eq.s32.totalorder %s28, 0
      %p140 = por %p138, %p139
      %p141 = scmp.ne.s32.totalorder %s127, %s128
      %p142 = scmp.eq.s32.totalorder %s29, 1
      %p143 = por %p141, %p142
      %p145 = scmp.ne.s32.totalorder %s128, %s144
      %p146 = scmp.eq.s32.totalorder %s29, 0
      %p147 = por %p145, %p146
      %s148 = sadd.s32 %s30, %s31
      %s149 = sadd.s32 %s42, %s38
      %s150 = ssub.s32 %s148, %s149
      %p151 = scmp.eq.s32.totalorder %s150, 0
      %s153 = sadd.s32 %s152, 1
      %s154 = scalar_select %p151, %s152, %s153
      %p157 = pneg %p151
      %p158 = scmp.eq.s32.totalorder %s23, 1
      %p159 = por %p157, %p158
      %p160 = scmp.ne.s32.totalorder %s152, %s155
      %p161 = scmp.eq.s32.totalorder %s23, 0
      %p162 = por %p160, %p161
      %p163 = scmp.ne.s32.totalorder %s152, %s155
      %p164 = scmp.eq.s32.totalorder %s28, 1
      %p165 = por %p163, %p164
      %p166 = scmp.ne.s32.totalorder %s155, %s156
      %p167 = scmp.eq.s32.totalorder %s28, 0
      %p168 = por %p166, %p167
      %p169 = scmp.ne.s32.totalorder %s155, %s156
      %p170 = scmp.eq.s32.totalorder %s29, 1
      %p171 = por %p169, %p170
      %p173 = scmp.ne.s32.totalorder %s156, %s172
      %p174 = scmp.eq.s32.totalorder %s29, 0
      %p175 = por %p173, %p174
      %s177 = sadd.s32 %s176, 1
      %p180 = scmp.eq.s32.totalorder %s23, 1
      %p181 = scmp.ne.s32.totalorder %s176, %s178
      %p182 = scmp.eq.s32.totalorder %s23, 0
      %p183 = por %p181, %p182
      %p184 = scmp.ne.s32.totalorder %s176, %s178
      %p185 = scmp.eq.s32.totalorder %s28, 1
      %p186 = por %p184, %p185
      %p187 = scmp.ne.s32.totalorder %s178, %s179
      %p188 = scmp.eq.s32.totalorder %s28, 0
      %p189 = por %p187, %p188
      %p190 = scmp.ne.s32.totalorder %s178, %s179
      %p191 = scmp.eq.s32.totalorder %s29, 1
      %p192 = por %p190, %p191
      %p194 = scmp.ne.s32.totalorder %s179, %s193
      %p195 = scmp.eq.s32.totalorder %s29, 0
      %p196 = por %p194, %p195
      %s197 = ssub.s32 %s30, %s42
      %p198 = scmp.eq.s32.totalorder %s197, 0
      %s200 = sadd.s32 %s199, 1
      %s201 = scalar_select %p198, %s199, %s200
      %p204 = pneg %p198
      %p205 = scmp.eq.s32.totalorder %s23, 1
      %p206 = por %p204, %p205
      %p207 = scmp.ne.s32.totalorder %s199, %s202
      %p208 = scmp.eq.s32.totalorder %s23, 0
      %p209 = por %p207, %p208
      %p210 = scmp.ne.s32.totalorder %s199, %s202
      %p211 = scmp.eq.s32.totalorder %s28, 1
      %p212 = por %p210, %p211
      %p213 = scmp.ne.s32.totalorder %s202, %s203
      %p214 = scmp.eq.s32.totalorder %s28, 0
      %p215 = por %p213, %p214
      %p216 = scmp.ne.s32.totalorder %s202, %s203
      %p217 = scmp.eq.s32.totalorder %s29, 1
      %p218 = por %p216, %p217
      %p220 = scmp.ne.s32.totalorder %s203, %s219
      %p221 = scmp.eq.s32.totalorder %s29, 0
      %p222 = por %p220, %p221
      %p223 = scmp.le.s32.totalorder 1, %s23
      %p224 = scmp.lt.s32.totalorder %s23, 3
      %p225 = pnand %p223, %p224
      %p226 = pneg %p225
      // Predicated region
      $region9: #{tpu_custom_call.1} parent=5 // pred_check
        _
      $region10: #{tpu_custom_call.1} parent=5 // pred_check_branch
        %228 = sbr.rel (%p225) target = $region12
      $region11: #{tpu_custom_call.1} parent=5 // pred_region
        %s229 = ssub.s32 %s23, 1
        // Predicated region
        $region13: #{tpu_custom_call.1} parent=11 // pred_check
          %p230 = pneg %p56
        $region14: #{tpu_custom_call.1} parent=11 // pred_check_branch
          %232 = sbr.rel (%p230) target = $region16
        $region15: #{tpu_custom_call.1} parent=11 // pred_region
          %s234 = ssub.s32 2048, 2048
          %235 = vsyncadd [#allocation3], %s234
          %s237 = sshll.u32 [#allocation2], 4
          %s238 = int_to_ptr.vmem [resolvable:$true] %s237
          %240 = dma.hbm_to_vmem [thread:$0]  %s0, 2048, %s238, [#allocation3]
        $region16: #{tpu_custom_call.1} parent=11 // pred_fallthru
          _
        // Predicated region
        $region17: #{tpu_custom_call.1} parent=11 // pred_check
          %p241 = pneg %p189
        $region18: #{tpu_custom_call.1} parent=11 // pred_check_branch
          %243 = sbr.rel (%p241) target = $region20
        $region19: #{tpu_custom_call.1} parent=11 // pred_region
          %s245 = ssub.s32 64, 64
          %246 = vsyncadd [#allocation12], %s245
          %s248 = sshll.u32 [#allocation11], 4
          %s249 = int_to_ptr.vmem [resolvable:$true] %s248
          %251 = dma.hbm_to_vmem [thread:$0]  %s5, 64, %s249, [#allocation12]
        $region20: #{tpu_custom_call.1} parent=11 // pred_fallthru
          _
      $region12: #{tpu_custom_call.1} parent=5 // pred_fallthru
        _
      %p252 = scmp.lt.s32.totalorder %s23, 2
      // Predicated region
      $region21: #{tpu_custom_call.1} parent=5 // pred_check
        %p253 = pneg %p252
      $region22: #{tpu_custom_call.1} parent=5 // pred_check_branch
        %255 = sbr.rel (%p253) target = $region24
      $region23: #{tpu_custom_call.1} parent=5 // pred_region
        // Predicated region
        $region25: #{tpu_custom_call.1} parent=23 // pred_check
          %p256 = pneg %p78
        $region26: #{tpu_custom_call.1} parent=23 // pred_check_branch
          %258 = sbr.rel (%p256) target = $region28
        $region27: #{tpu_custom_call.1} parent=23 // pred_region
          %s259 = sand.u32 %s23, 1
          %s260 = scalar_lea.sflag [#allocation6], %s259
          %s261 = sand.u32 %s68, 1
          %s262 = smul.addr %s261, 2048
          %s263 = scalar_lea.vmem [#allocation5], %s262
          %s264 = sadd.s32 %s30, %s31
          %s265 = smul.u32 4, %s264
          %s267 = ssub.s32 32768, 32768
          %268 = vsyncadd %s260, %s267
          %s269 = smul.addr %s265, 128
          %s270 = scalar_lea.hbm %s1, %s269
          %s271 = sshll.u32 %s263, 4
          %s272 = int_to_ptr.vmem [resolvable:$true] %s271
          %277 = dma.hbm_to_vmem [thread:$0]  %s270, 32768, %s272, %s260, 1024, 512, 32
        $region28: #{tpu_custom_call.1} parent=23 // pred_fallthru
          _
        // Predicated region
        $region29: #{tpu_custom_call.1} parent=23 // pred_check
          %p278 = pneg %p106
        $region30: #{tpu_custom_call.1} parent=23 // pred_check_branch
          %280 = sbr.rel (%p278) target = $region32
        $region31: #{tpu_custom_call.1} parent=23 // pred_region
          %s281 = sand.u32 %s23, 1
          %s282 = scalar_lea.sflag [#allocation6], %s281
          %s283 = sand.u32 %s96, 1
          %s284 = smul.addr %s283, 4
          %s285 = scalar_lea.vmem [#allocation7], %s284
          %s286 = sadd.s32 %s30, %s31
          %s287 = smul.u32 4, %s286
          %s289 = ssub.s32 64, 64
          %290 = vsyncadd %s282, %s289
          %s291 = smul.addr %s287, 16
          %s292 = scalar_lea.hbm %s2, %s291
          %s294 = sshll.u32 %s285, 4
          %s295 = int_to_ptr.vmem [resolvable:$true] %s294
          %297 = dma.hbm_to_vmem [thread:$0]  %s292, 64, %s295, %s282
        $region32: #{tpu_custom_call.1} parent=23 // pred_fallthru
          _
        // Predicated region
        $region33: #{tpu_custom_call.1} parent=23 // pred_check
          %p298 = pneg %p134
        $region34: #{tpu_custom_call.1} parent=23 // pred_check_branch
          %300 = sbr.rel (%p298) target = $region36
        $region35: #{tpu_custom_call.1} parent=23 // pred_region
          %s301 = sand.u32 %s23, 1
          %s302 = scalar_lea.sflag [#allocation9], %s301
          %s303 = sand.u32 %s124, 1
          %s304 = smul.addr %s303, 4
          %s305 = scalar_lea.vmem [#allocation8], %s304
          %s306 = sadd.s32 %s30, %s31
          %s307 = smul.u32 4, %s306
          %s309 = ssub.s32 64, 64
          %310 = vsyncadd %s302, %s309
          %s311 = smul.addr %s307, 16
          %s312 = scalar_lea.hbm %s3, %s311
          %s314 = sshll.u32 %s305, 4
          %s315 = int_to_ptr.vmem [resolvable:$true] %s314
          %317 = dma.hbm_to_vmem [thread:$0]  %s312, 64, %s315, %s302
        $region36: #{tpu_custom_call.1} parent=23 // pred_fallthru
          _
        // Predicated region
        $region37: #{tpu_custom_call.1} parent=23 // pred_check
          %p318 = pneg %p162
        $region38: #{tpu_custom_call.1} parent=23 // pred_check_branch
          %320 = sbr.rel (%p318) target = $region40
        $region39: #{tpu_custom_call.1} parent=23 // pred_region
          %s321 = sand.u32 %s23, 1
          %s322 = scalar_lea.sflag [#allocation9], %s321
          %s323 = sand.u32 %s152, 1
          %s324 = smul.addr %s323, 512
          %s325 = scalar_lea.vmem [#allocation10], %s324
          %s326 = sadd.s32 %s30, %s31
          %s327 = smul.u32 16, %s326
          %s329 = ssub.s32 8192, 8192
          %330 = vsyncadd %s322, %s329
          %s331 = smul.addr %s327, 4
          %s332 = smul.addr %s331, 128
          %s333 = scalar_lea.hbm %s4, %s332
          %s334 = sshll.u32 %s325, 4
          %s335 = int_to_ptr.vmem [resolvable:$true] %s334
          %340 = dma.hbm_to_vmem [thread:$0]  %s333, 8192, %s335, %s322, 512, 512, 32
        $region40: #{tpu_custom_call.1} parent=23 // pred_fallthru
          _
      $region24: #{tpu_custom_call.1} parent=5 // pred_fallthru
        _
      %p341 = scmp.le.s32.totalorder 1, %s23
      %p342 = scmp.lt.s32.totalorder %s23, 3
      %p343 = pnand %p341, %p342
      %p344 = pneg %p343
      // Predicated region
      $region41: #{tpu_custom_call.1} parent=5 // pred_check
        _
      $region42: #{tpu_custom_call.1} parent=5 // pred_check_branch
        %346 = sbr.rel (%p343) target = $region44
      $region43: #{tpu_custom_call.1} parent=5 // pred_region
        %s347 = ssub.s32 %s23, 1
        // Predicated region
        $region45: #{tpu_custom_call.1} parent=43 // pred_check
          %p348 = pneg %p56
        $region46: #{tpu_custom_call.1} parent=43 // pred_check_branch
          %350 = sbr.rel (%p348) target = $region48
        $region47: #{tpu_custom_call.1} parent=43 // pred_region
          %351 = dma.done [#allocation3], 2048
        $region48: #{tpu_custom_call.1} parent=43 // pred_fallthru
          _
        %s352 = sand.u32 %s28, 1
        %s353 = scalar_lea.sflag [#allocation6], %s352
        %s354 = sand.u32 %s71, 1
        %s355 = smul.addr %s354, 2048
        %s356 = scalar_lea.vmem [#allocation5], %s355
        // Predicated region
        $region49: #{tpu_custom_call.1} parent=43 // pred_check
          %p357 = pneg %p84
        $region50: #{tpu_custom_call.1} parent=43 // pred_check_branch
          %359 = sbr.rel (%p357) target = $region52
        $region51: #{tpu_custom_call.1} parent=43 // pred_region
          %360 = dma.done %s353, 32768
        $region52: #{tpu_custom_call.1} parent=43 // pred_fallthru
          _
        %s361 = sand.u32 %s28, 1
        %s362 = scalar_lea.sflag [#allocation6], %s361
        %s363 = sand.u32 %s99, 1
        %s364 = smul.addr %s363, 4
        %s365 = scalar_lea.vmem [#allocation7], %s364
        // Predicated region
        $region53: #{tpu_custom_call.1} parent=43 // pred_check
          %p366 = pneg %p112
        $region54: #{tpu_custom_call.1} parent=43 // pred_check_branch
          %368 = sbr.rel (%p366) target = $region56
        $region55: #{tpu_custom_call.1} parent=43 // pred_region
          %369 = dma.done %s362, 64
        $region56: #{tpu_custom_call.1} parent=43 // pred_fallthru
          _
        %s370 = sand.u32 %s28, 1
        %s371 = scalar_lea.sflag [#allocation9], %s370
        %s372 = sand.u32 %s127, 1
        %s373 = smul.addr %s372, 4
        %s374 = scalar_lea.vmem [#allocation8], %s373
        // Predicated region
        $region57: #{tpu_custom_call.1} parent=43 // pred_check
          %p375 = pneg %p140
        $region58: #{tpu_custom_call.1} parent=43 // pred_check_branch
          %377 = sbr.rel (%p375) target = $region60
        $region59: #{tpu_custom_call.1} parent=43 // pred_region
          %378 = dma.done %s371, 64
        $region60: #{tpu_custom_call.1} parent=43 // pred_fallthru
          _
        %s379 = sand.u32 %s28, 1
        %s380 = scalar_lea.sflag [#allocation9], %s379
        %s381 = sand.u32 %s155, 1
        %s382 = smul.addr %s381, 512
        %s383 = scalar_lea.vmem [#allocation10], %s382
        // Predicated region
        $region61: #{tpu_custom_call.1} parent=43 // pred_check
          %p384 = pneg %p168
        $region62: #{tpu_custom_call.1} parent=43 // pred_check_branch
          %386 = sbr.rel (%p384) target = $region64
        $region63: #{tpu_custom_call.1} parent=43 // pred_region
          %387 = dma.done %s380, 8192
        $region64: #{tpu_custom_call.1} parent=43 // pred_fallthru
          _
        // Predicated region
        $region65: #{tpu_custom_call.1} parent=43 // pred_check
          %p388 = pneg %p189
        $region66: #{tpu_custom_call.1} parent=43 // pred_check_branch
          %390 = sbr.rel (%p388) target = $region68
        $region67: #{tpu_custom_call.1} parent=43 // pred_region
          %391 = dma.done [#allocation12], 64
        $region68: #{tpu_custom_call.1} parent=43 // pred_fallthru
          _
        %p392 = pneg %p56
        %p393 = pneg %p53
        %s394 = sand.u32 %s28, 1
        %s395 = scalar_lea.sflag [#allocation6], %s394
        %s396 = sand.u32 %s71, 1
        %s397 = smul.addr %s396, 2048
        %s398 = scalar_lea.vmem [#allocation5], %s397
        %p399 = pneg %p84
        %p400 = pneg %p81
        %s401 = sand.u32 %s28, 1
        %s402 = scalar_lea.sflag [#allocation6], %s401
        %s403 = sand.u32 %s99, 1
        %s404 = smul.addr %s403, 4
        %s405 = scalar_lea.vmem [#allocation7], %s404
        %p406 = pneg %p112
        %p407 = pneg %p109
        %s408 = sand.u32 %s28, 1
        %s409 = scalar_lea.sflag [#allocation9], %s408
        %s410 = sand.u32 %s127, 1
        %s411 = smul.addr %s410, 4
        %s412 = scalar_lea.vmem [#allocation8], %s411
        %p413 = pneg %p140
        %p414 = pneg %p137
        %s415 = sand.u32 %s28, 1
        %s416 = scalar_lea.sflag [#allocation9], %s415
        %s417 = sand.u32 %s155, 1
        %s418 = smul.addr %s417, 512
        %s419 = scalar_lea.vmem [#allocation10], %s418
        %p420 = pneg %p168
        %p421 = pneg %p165
        %p422 = pneg %p189
        %p423 = pneg %p186
        %p424 = pneg %p215
        %p425 = pneg %p212
        %s426 = sand.u32 %s202, 1
        %s427 = scalar_lea.sflag [#allocation4], %s426
        %s428 = sand.u32 %s202, 1
        %s429 = smul.addr %s428, 32
        %s430 = scalar_lea.vmem [#allocation13], %s429
        %s431 = sadd.s32 %s32, %s33
        %s432 = smul.u32 4, %s431
        %s433 = sadd.s32 %s32, %s33
        %s434 = smul.u32 4, %s433
        %s435 = sadd.s32 %s32, %s33
        %s436 = smul.u32 4, %s435
        %s437 = sadd.s32 %s32, %s33
        %s438 = smul.u32 16, %s437
        %p439 = scmp.eq.s32.totalorder %s33, 0
        // Predicated region
        $region69: #{tpu_custom_call.1} parent=43 // pred_check
          %p440 = pneg %p439
        $region70: #{tpu_custom_call.1} parent=43 // pred_check_branch
          %442 = sbr.rel (%p440) target = $region72
        $region71: #{tpu_custom_call.1} parent=43 // pred_region
          %443 = vst [vmem:[%s430] sm:$0xff] 0.0
          %444 = vst [vmem:[%s430 + $0x8] sm:$0xff] 0.0
          %445 = vst [vmem:[%s430 + $0x10] sm:$0xff] 0.0
          %446 = vst [vmem:[%s430 + $0x18] sm:$0xff] 0.0
        $region72: #{tpu_custom_call.1} parent=43 // pred_fallthru
          _
        %v447 = vld [vmem:[#allocation2] sm:$0xff]
        %v448 = vld [vmem:[#allocation2 + $0x8] sm:$0xff]
        %v449 = vld [vmem:[#allocation2 + $0x10] sm:$0xff]
        %v450 = vld [vmem:[#allocation2 + $0x18] sm:$0xff]
        %v451 = vld [vmem:[#allocation2 + $0x20] sm:$0xff]
        %v452 = vld [vmem:[#allocation2 + $0x28] sm:$0xff]
        %v453 = vld [vmem:[#allocation2 + $0x30] sm:$0xff]
        %v454 = vld [vmem:[#allocation2 + $0x38] sm:$0xff]
        %v455 = vld [vmem:[#allocation2 + $0x40] sm:$0xff]
        %v456 = vld [vmem:[#allocation2 + $0x48] sm:$0xff]
        %v457 = vld [vmem:[#allocation2 + $0x50] sm:$0xff]
        %v458 = vld [vmem:[#allocation2 + $0x58] sm:$0xff]
        %v459 = vld [vmem:[#allocation2 + $0x60] sm:$0xff]
        %v460 = vld [vmem:[#allocation2 + $0x68] sm:$0xff]
        %v461 = vld [vmem:[#allocation2 + $0x70] sm:$0xff]
        %v462 = vld [vmem:[#allocation2 + $0x78] sm:$0xff]
        %v463 = vpack.c.bf16 %v447, %v447
        %v464 = vpack.c.bf16 %v448, %v448
        %v465 = vpack.c.bf16 %v449, %v449
        %v466 = vpack.c.bf16 %v450, %v450
        %v467 = vpack.c.bf16 %v451, %v451
        %v468 = vpack.c.bf16 %v452, %v452
        %v469 = vpack.c.bf16 %v453, %v453
        %v470 = vpack.c.bf16 %v454, %v454
        %v471 = vpack.c.bf16 %v455, %v455
        %v472 = vpack.c.bf16 %v456, %v456
        %v473 = vpack.c.bf16 %v457, %v457
        %v474 = vpack.c.bf16 %v458, %v458
        %v475 = vpack.c.bf16 %v459, %v459
        %v476 = vpack.c.bf16 %v460, %v460
        %v477 = vpack.c.bf16 %v461, %v461
        %v478 = vpack.c.bf16 %v462, %v462
        %v479 = vld [vmem:[%s356] sm:$0xff]
        %v480 = vld [vmem:[%s356 + $0x8] sm:$0xff]
        %v481 = vld [vmem:[%s356 + $0x10] sm:$0xff]
        %v482 = vld [vmem:[%s356 + $0x18] sm:$0xff]
        %v483 = vld [vmem:[%s356 + $0x20] sm:$0xff]
        %v484 = vld [vmem:[%s356 + $0x28] sm:$0xff]
        %v485 = vld [vmem:[%s356 + $0x30] sm:$0xff]
        %v486 = vld [vmem:[%s356 + $0x38] sm:$0xff]
        %v487 = vld [vmem:[%s356 + $0x40] sm:$0xff]
        %v488 = vld [vmem:[%s356 + $0x48] sm:$0xff]
        %v489 = vld [vmem:[%s356 + $0x50] sm:$0xff]
        %v490 = vld [vmem:[%s356 + $0x58] sm:$0xff]
        %v491 = vld [vmem:[%s356 + $0x60] sm:$0xff]
        %v492 = vld [vmem:[%s356 + $0x68] sm:$0xff]
        %v493 = vld [vmem:[%s356 + $0x70] sm:$0xff]
        %v494 = vld [vmem:[%s356 + $0x78] sm:$0xff]
        %v495 = vld [vmem:[%s356 + $0x80] sm:$0xff]
        %v496 = vld [vmem:[%s356 + $0x88] sm:$0xff]
        %v497 = vld [vmem:[%s356 + $0x90] sm:$0xff]
        %v498 = vld [vmem:[%s356 + $0x98] sm:$0xff]
        %v499 = vld [vmem:[%s356 + $0xa0] sm:$0xff]
        %v500 = vld [vmem:[%s356 + $0xa8] sm:$0xff]
        %v501 = vld [vmem:[%s356 + $0xb0] sm:$0xff]
        %v502 = vld [vmem:[%s356 + $0xb8] sm:$0xff]
        %v503 = vld [vmem:[%s356 + $0xc0] sm:$0xff]
        %v504 = vld [vmem:[%s356 + $0xc8] sm:$0xff]
        %v505 = vld [vmem:[%s356 + $0xd0] sm:$0xff]
        %v506 = vld [vmem:[%s356 + $0xd8] sm:$0xff]
        %v507 = vld [vmem:[%s356 + $0xe0] sm:$0xff]
        %v508 = vld [vmem:[%s356 + $0xe8] sm:$0xff]
        %v509 = vld [vmem:[%s356 + $0xf0] sm:$0xff]
        %v510 = vld [vmem:[%s356 + $0xf8] sm:$0xff]
        %v511 = vld [vmem:[%s356 + $0x100] sm:$0xff]
        %v512 = vld [vmem:[%s356 + $0x108] sm:$0xff]
        %v513 = vld [vmem:[%s356 + $0x110] sm:$0xff]
        %v514 = vld [vmem:[%s356 + $0x118] sm:$0xff]
        %v515 = vld [vmem:[%s356 + $0x120] sm:$0xff]
        %v516 = vld [vmem:[%s356 + $0x128] sm:$0xff]
        %v517 = vld [vmem:[%s356 + $0x130] sm:$0xff]
        %v518 = vld [vmem:[%s356 + $0x138] sm:$0xff]
        %v519 = vld [vmem:[%s356 + $0x140] sm:$0xff]
        %v520 = vld [vmem:[%s356 + $0x148] sm:$0xff]
        %v521 = vld [vmem:[%s356 + $0x150] sm:$0xff]
        %v522 = vld [vmem:[%s356 + $0x158] sm:$0xff]
        %v523 = vld [vmem:[%s356 + $0x160] sm:$0xff]
        %v524 = vld [vmem:[%s356 + $0x168] sm:$0xff]
        %v525 = vld [vmem:[%s356 + $0x170] sm:$0xff]
        %v526 = vld [vmem:[%s356 + $0x178] sm:$0xff]
        %v527 = vld [vmem:[%s356 + $0x180] sm:$0xff]
        %v528 = vld [vmem:[%s356 + $0x188] sm:$0xff]
        %v529 = vld [vmem:[%s356 + $0x190] sm:$0xff]
        %v530 = vld [vmem:[%s356 + $0x198] sm:$0xff]
        %v531 = vld [vmem:[%s356 + $0x1a0] sm:$0xff]
        %v532 = vld [vmem:[%s356 + $0x1a8] sm:$0xff]
        %v533 = vld [vmem:[%s356 + $0x1b0] sm:$0xff]
        %v534 = vld [vmem:[%s356 + $0x1b8] sm:$0xff]
        %v535 = vld [vmem:[%s356 + $0x1c0] sm:$0xff]
        %v536 = vld [vmem:[%s356 + $0x1c8] sm:$0xff]
        %v537 = vld [vmem:[%s356 + $0x1d0] sm:$0xff]
        %v538 = vld [vmem:[%s356 + $0x1d8] sm:$0xff]
        %v539 = vld [vmem:[%s356 + $0x1e0] sm:$0xff]
        %v540 = vld [vmem:[%s356 + $0x1e8] sm:$0xff]
        %v541 = vld [vmem:[%s356 + $0x1f0] sm:$0xff]
        %v542 = vld [vmem:[%s356 + $0x1f8] sm:$0xff]
        %v543 = vld [vmem:[%s356 + $0x200] sm:$0xff]
        %v544 = vld [vmem:[%s356 + $0x208] sm:$0xff]
        %v545 = vld [vmem:[%s356 + $0x210] sm:$0xff]
        %v546 = vld [vmem:[%s356 + $0x218] sm:$0xff]
        %v547 = vld [vmem:[%s356 + $0x220] sm:$0xff]
        %v548 = vld [vmem:[%s356 + $0x228] sm:$0xff]
        %v549 = vld [vmem:[%s356 + $0x230] sm:$0xff]
        %v550 = vld [vmem:[%s356 + $0x238] sm:$0xff]
        %v551 = vld [vmem:[%s356 + $0x240] sm:$0xff]
        %v552 = vld [vmem:[%s356 + $0x248] sm:$0xff]
        %v553 = vld [vmem:[%s356 + $0x250] sm:$0xff]
        %v554 = vld [vmem:[%s356 + $0x258] sm:$0xff]
        %v555 = vld [vmem:[%s356 + $0x260] sm:$0xff]
        %v556 = vld [vmem:[%s356 + $0x268] sm:$0xff]
        %v557 = vld [vmem:[%s356 + $0x270] sm:$0xff]
        %v558 = vld [vmem:[%s356 + $0x278] sm:$0xff]
        %v559 = vld [vmem:[%s356 + $0x280] sm:$0xff]
        %v560 = vld [vmem:[%s356 + $0x288] sm:$0xff]
        %v561 = vld [vmem:[%s356 + $0x290] sm:$0xff]
        %v562 = vld [vmem:[%s356 + $0x298] sm:$0xff]
        %v563 = vld [vmem:[%s356 + $0x2a0] sm:$0xff]
        %v564 = vld [vmem:[%s356 + $0x2a8] sm:$0xff]
        %v565 = vld [vmem:[%s356 + $0x2b0] sm:$0xff]
        %v566 = vld [vmem:[%s356 + $0x2b8] sm:$0xff]
        %v567 = vld [vmem:[%s356 + $0x2c0] sm:$0xff]
        %v568 = vld [vmem:[%s356 + $0x2c8] sm:$0xff]
        %v569 = vld [vmem:[%s356 + $0x2d0] sm:$0xff]
        %v570 = vld [vmem:[%s356 + $0x2d8] sm:$0xff]
        %v571 = vld [vmem:[%s356 + $0x2e0] sm:$0xff]
        %v572 = vld [vmem:[%s356 + $0x2e8] sm:$0xff]
        %v573 = vld [vmem:[%s356 + $0x2f0] sm:$0xff]
        %v574 = vld [vmem:[%s356 + $0x2f8] sm:$0xff]
        %v575 = vld [vmem:[%s356 + $0x300] sm:$0xff]
        %v576 = vld [vmem:[%s356 + $0x308] sm:$0xff]
        %v577 = vld [vmem:[%s356 + $0x310] sm:$0xff]
        %v578 = vld [vmem:[%s356 + $0x318] sm:$0xff]
        %v579 = vld [vmem:[%s356 + $0x320] sm:$0xff]
        %v580 = vld [vmem:[%s356 + $0x328] sm:$0xff]
        %v581 = vld [vmem:[%s356 + $0x330] sm:$0xff]
        %v582 = vld [vmem:[%s356 + $0x338] sm:$0xff]
        %v583 = vld [vmem:[%s356 + $0x340] sm:$0xff]
        %v584 = vld [vmem:[%s356 + $0x348] sm:$0xff]
        %v585 = vld [vmem:[%s356 + $0x350] sm:$0xff]
        %v586 = vld [vmem:[%s356 + $0x358] sm:$0xff]
        %v587 = vld [vmem:[%s356 + $0x360] sm:$0xff]
        %v588 = vld [vmem:[%s356 + $0x368] sm:$0xff]
        %v589 = vld [vmem:[%s356 + $0x370] sm:$0xff]
        %v590 = vld [vmem:[%s356 + $0x378] sm:$0xff]
        %v591 = vld [vmem:[%s356 + $0x380] sm:$0xff]
        %v592 = vld [vmem:[%s356 + $0x388] sm:$0xff]
        %v593 = vld [vmem:[%s356 + $0x390] sm:$0xff]
        %v594 = vld [vmem:[%s356 + $0x398] sm:$0xff]
        %v595 = vld [vmem:[%s356 + $0x3a0] sm:$0xff]
        %v596 = vld [vmem:[%s356 + $0x3a8] sm:$0xff]
        %v597 = vld [vmem:[%s356 + $0x3b0] sm:$0xff]
        %v598 = vld [vmem:[%s356 + $0x3b8] sm:$0xff]
        %v599 = vld [vmem:[%s356 + $0x3c0] sm:$0xff]
        %v600 = vld [vmem:[%s356 + $0x3c8] sm:$0xff]
        %v601 = vld [vmem:[%s356 + $0x3d0] sm:$0xff]
        %v602 = vld [vmem:[%s356 + $0x3d8] sm:$0xff]
        %v603 = vld [vmem:[%s356 + $0x3e0] sm:$0xff]
        %v604 = vld [vmem:[%s356 + $0x3e8] sm:$0xff]
        %v605 = vld [vmem:[%s356 + $0x3f0] sm:$0xff]
        %v606 = vld [vmem:[%s356 + $0x3f8] sm:$0xff]
        %v607 = vld [vmem:[%s356 + $0x400] sm:$0xff]
        %v608 = vld [vmem:[%s356 + $0x408] sm:$0xff]
        %v609 = vld [vmem:[%s356 + $0x410] sm:$0xff]
        %v610 = vld [vmem:[%s356 + $0x418] sm:$0xff]
        %v611 = vld [vmem:[%s356 + $0x420] sm:$0xff]
        %v612 = vld [vmem:[%s356 + $0x428] sm:$0xff]
        %v613 = vld [vmem:[%s356 + $0x430] sm:$0xff]
        %v614 = vld [vmem:[%s356 + $0x438] sm:$0xff]
        %v615 = vld [vmem:[%s356 + $0x440] sm:$0xff]
        %v616 = vld [vmem:[%s356 + $0x448] sm:$0xff]
        %v617 = vld [vmem:[%s356 + $0x450] sm:$0xff]
        %v618 = vld [vmem:[%s356 + $0x458] sm:$0xff]
        %v619 = vld [vmem:[%s356 + $0x460] sm:$0xff]
        %v620 = vld [vmem:[%s356 + $0x468] sm:$0xff]
        %v621 = vld [vmem:[%s356 + $0x470] sm:$0xff]
        %v622 = vld [vmem:[%s356 + $0x478] sm:$0xff]
        %v623 = vld [vmem:[%s356 + $0x480] sm:$0xff]
        %v624 = vld [vmem:[%s356 + $0x488] sm:$0xff]
        %v625 = vld [vmem:[%s356 + $0x490] sm:$0xff]
        %v626 = vld [vmem:[%s356 + $0x498] sm:$0xff]
        %v627 = vld [vmem:[%s356 + $0x4a0] sm:$0xff]
        %v628 = vld [vmem:[%s356 + $0x4a8] sm:$0xff]
        %v629 = vld [vmem:[%s356 + $0x4b0] sm:$0xff]
        %v630 = vld [vmem:[%s356 + $0x4b8] sm:$0xff]
        %v631 = vld [vmem:[%s356 + $0x4c0] sm:$0xff]
        %v632 = vld [vmem:[%s356 + $0x4c8] sm:$0xff]
        %v633 = vld [vmem:[%s356 + $0x4d0] sm:$0xff]
        %v634 = vld [vmem:[%s356 + $0x4d8] sm:$0xff]
        %v635 = vld [vmem:[%s356 + $0x4e0] sm:$0xff]
        %v636 = vld [vmem:[%s356 + $0x4e8] sm:$0xff]
        %v637 = vld [vmem:[%s356 + $0x4f0] sm:$0xff]
        %v638 = vld [vmem:[%s356 + $0x4f8] sm:$0xff]
        %v639 = vld [vmem:[%s356 + $0x500] sm:$0xff]
        %v640 = vld [vmem:[%s356 + $0x508] sm:$0xff]
        %v641 = vld [vmem:[%s356 + $0x510] sm:$0xff]
        %v642 = vld [vmem:[%s356 + $0x518] sm:$0xff]
        %v643 = vld [vmem:[%s356 + $0x520] sm:$0xff]
        %v644 = vld [vmem:[%s356 + $0x528] sm:$0xff]
        %v645 = vld [vmem:[%s356 + $0x530] sm:$0xff]
        %v646 = vld [vmem:[%s356 + $0x538] sm:$0xff]
        %v647 = vld [vmem:[%s356 + $0x540] sm:$0xff]
        %v648 = vld [vmem:[%s356 + $0x548] sm:$0xff]
        %v649 = vld [vmem:[%s356 + $0x550] sm:$0xff]
        %v650 = vld [vmem:[%s356 + $0x558] sm:$0xff]
        %v651 = vld [vmem:[%s356 + $0x560] sm:$0xff]
        %v652 = vld [vmem:[%s356 + $0x568] sm:$0xff]
        %v653 = vld [vmem:[%s356 + $0x570] sm:$0xff]
        %v654 = vld [vmem:[%s356 + $0x578] sm:$0xff]
        %v655 = vld [vmem:[%s356 + $0x580] sm:$0xff]
        %v656 = vld [vmem:[%s356 + $0x588] sm:$0xff]
        %v657 = vld [vmem:[%s356 + $0x590] sm:$0xff]
        %v658 = vld [vmem:[%s356 + $0x598] sm:$0xff]
        %v659 = vld [vmem:[%s356 + $0x5a0] sm:$0xff]
        %v660 = vld [vmem:[%s356 + $0x5a8] sm:$0xff]
        %v661 = vld [vmem:[%s356 + $0x5b0] sm:$0xff]
        %v662 = vld [vmem:[%s356 + $0x5b8] sm:$0xff]
        %v663 = vld [vmem:[%s356 + $0x5c0] sm:$0xff]
        %v664 = vld [vmem:[%s356 + $0x5c8] sm:$0xff]
        %v665 = vld [vmem:[%s356 + $0x5d0] sm:$0xff]
        %v666 = vld [vmem:[%s356 + $0x5d8] sm:$0xff]
        %v667 = vld [vmem:[%s356 + $0x5e0] sm:$0xff]
        %v668 = vld [vmem:[%s356 + $0x5e8] sm:$0xff]
        %v669 = vld [vmem:[%s356 + $0x5f0] sm:$0xff]
        %v670 = vld [vmem:[%s356 + $0x5f8] sm:$0xff]
        %v671 = vld [vmem:[%s356 + $0x600] sm:$0xff]
        %v672 = vld [vmem:[%s356 + $0x608] sm:$0xff]
        %v673 = vld [vmem:[%s356 + $0x610] sm:$0xff]
        %v674 = vld [vmem:[%s356 + $0x618] sm:$0xff]
        %v675 = vld [vmem:[%s356 + $0x620] sm:$0xff]
        %v676 = vld [vmem:[%s356 + $0x628] sm:$0xff]
        %v677 = vld [vmem:[%s356 + $0x630] sm:$0xff]
        %v678 = vld [vmem:[%s356 + $0x638] sm:$0xff]
        %v679 = vld [vmem:[%s356 + $0x640] sm:$0xff]
        %v680 = vld [vmem:[%s356 + $0x648] sm:$0xff]
        %v681 = vld [vmem:[%s356 + $0x650] sm:$0xff]
        %v682 = vld [vmem:[%s356 + $0x658] sm:$0xff]
        %v683 = vld [vmem:[%s356 + $0x660] sm:$0xff]
        %v684 = vld [vmem:[%s356 + $0x668] sm:$0xff]
        %v685 = vld [vmem:[%s356 + $0x670] sm:$0xff]
        %v686 = vld [vmem:[%s356 + $0x678] sm:$0xff]
        %v687 = vld [vmem:[%s356 + $0x680] sm:$0xff]
        %v688 = vld [vmem:[%s356 + $0x688] sm:$0xff]
        %v689 = vld [vmem:[%s356 + $0x690] sm:$0xff]
        %v690 = vld [vmem:[%s356 + $0x698] sm:$0xff]
        %v691 = vld [vmem:[%s356 + $0x6a0] sm:$0xff]
        %v692 = vld [vmem:[%s356 + $0x6a8] sm:$0xff]
        %v693 = vld [vmem:[%s356 + $0x6b0] sm:$0xff]
        %v694 = vld [vmem:[%s356 + $0x6b8] sm:$0xff]
        %v695 = vld [vmem:[%s356 + $0x6c0] sm:$0xff]
        %v696 = vld [vmem:[%s356 + $0x6c8] sm:$0xff]
        %v697 = vld [vmem:[%s356 + $0x6d0] sm:$0xff]
        %v698 = vld [vmem:[%s356 + $0x6d8] sm:$0xff]
        %v699 = vld [vmem:[%s356 + $0x6e0] sm:$0xff]
        %v700 = vld [vmem:[%s356 + $0x6e8] sm:$0xff]
        %v701 = vld [vmem:[%s356 + $0x6f0] sm:$0xff]
        %v702 = vld [vmem:[%s356 + $0x6f8] sm:$0xff]
        %v703 = vld [vmem:[%s356 + $0x700] sm:$0xff]
        %v704 = vld [vmem:[%s356 + $0x708] sm:$0xff]
        %v705 = vld [vmem:[%s356 + $0x710] sm:$0xff]
        %v706 = vld [vmem:[%s356 + $0x718] sm:$0xff]
        %v707 = vld [vmem:[%s356 + $0x720] sm:$0xff]
        %v708 = vld [vmem:[%s356 + $0x728] sm:$0xff]
        %v709 = vld [vmem:[%s356 + $0x730] sm:$0xff]
        %v710 = vld [vmem:[%s356 + $0x738] sm:$0xff]
        %v711 = vld [vmem:[%s356 + $0x740] sm:$0xff]
        %v712 = vld [vmem:[%s356 + $0x748] sm:$0xff]
        %v713 = vld [vmem:[%s356 + $0x750] sm:$0xff]
        %v714 = vld [vmem:[%s356 + $0x758] sm:$0xff]
        %v715 = vld [vmem:[%s356 + $0x760] sm:$0xff]
        %v716 = vld [vmem:[%s356 + $0x768] sm:$0xff]
        %v717 = vld [vmem:[%s356 + $0x770] sm:$0xff]
        %v718 = vld [vmem:[%s356 + $0x778] sm:$0xff]
        %v719 = vld [vmem:[%s356 + $0x780] sm:$0xff]
        %v720 = vld [vmem:[%s356 + $0x788] sm:$0xff]
        %v721 = vld [vmem:[%s356 + $0x790] sm:$0xff]
        %v722 = vld [vmem:[%s356 + $0x798] sm:$0xff]
        %v723 = vld [vmem:[%s356 + $0x7a0] sm:$0xff]
        %v724 = vld [vmem:[%s356 + $0x7a8] sm:$0xff]
        %v725 = vld [vmem:[%s356 + $0x7b0] sm:$0xff]
        %v726 = vld [vmem:[%s356 + $0x7b8] sm:$0xff]
        %v727 = vld [vmem:[%s356 + $0x7c0] sm:$0xff]
        %v728 = vld [vmem:[%s356 + $0x7c8] sm:$0xff]
        %v729 = vld [vmem:[%s356 + $0x7d0] sm:$0xff]
        %v730 = vld [vmem:[%s356 + $0x7d8] sm:$0xff]
        %v731 = vld [vmem:[%s356 + $0x7e0] sm:$0xff]
        %v732 = vld [vmem:[%s356 + $0x7e8] sm:$0xff]
        %v733 = vld [vmem:[%s356 + $0x7f0] sm:$0xff]
        %v734 = vld [vmem:[%s356 + $0x7f8] sm:$0xff]
        %v735 = vunpack.c.l.s8.bf16 %v479
        %v736 = vunpack.c.l.s8.bf16 %v480
        %v737 = vunpack.c.l.s8.bf16 %v481
        %v738 = vunpack.c.l.s8.bf16 %v482
        %v739 = vunpack.c.h.s8.bf16 %v479
        %v740 = vunpack.c.h.s8.bf16 %v480
        %v741 = vunpack.c.h.s8.bf16 %v481
        %v742 = vunpack.c.h.s8.bf16 %v482
        %v743 = vunpack.c.l.s8.bf16 %v483
        %v744 = vunpack.c.l.s8.bf16 %v484
        %v745 = vunpack.c.l.s8.bf16 %v485
        %v746 = vunpack.c.l.s8.bf16 %v486
        %v747 = vunpack.c.h.s8.bf16 %v483
        %v748 = vunpack.c.h.s8.bf16 %v484
        %v749 = vunpack.c.h.s8.bf16 %v485
        %v750 = vunpack.c.h.s8.bf16 %v486
        %v751 = vunpack.c.l.s8.bf16 %v487
        %v752 = vunpack.c.l.s8.bf16 %v488
        %v753 = vunpack.c.l.s8.bf16 %v489
        %v754 = vunpack.c.l.s8.bf16 %v490
        %v755 = vunpack.c.h.s8.bf16 %v487
        %v756 = vunpack.c.h.s8.bf16 %v488
        %v757 = vunpack.c.h.s8.bf16 %v489
        %v758 = vunpack.c.h.s8.bf16 %v490
        %v759 = vunpack.c.l.s8.bf16 %v491
        %v760 = vunpack.c.l.s8.bf16 %v492
        %v761 = vunpack.c.l.s8.bf16 %v493
        %v762 = vunpack.c.l.s8.bf16 %v494
        %v763 = vunpack.c.h.s8.bf16 %v491
        %v764 = vunpack.c.h.s8.bf16 %v492
        %v765 = vunpack.c.h.s8.bf16 %v493
        %v766 = vunpack.c.h.s8.bf16 %v494
        %v767 = vunpack.c.l.s8.bf16 %v495
        %v768 = vunpack.c.l.s8.bf16 %v496
        %v769 = vunpack.c.l.s8.bf16 %v497
        %v770 = vunpack.c.l.s8.bf16 %v498
        %v771 = vunpack.c.h.s8.bf16 %v495
        %v772 = vunpack.c.h.s8.bf16 %v496
        %v773 = vunpack.c.h.s8.bf16 %v497
        %v774 = vunpack.c.h.s8.bf16 %v498
        %v775 = vunpack.c.l.s8.bf16 %v499
        %v776 = vunpack.c.l.s8.bf16 %v500
        %v777 = vunpack.c.l.s8.bf16 %v501
        %v778 = vunpack.c.l.s8.bf16 %v502
        %v779 = vunpack.c.h.s8.bf16 %v499
        %v780 = vunpack.c.h.s8.bf16 %v500
        %v781 = vunpack.c.h.s8.bf16 %v501
        %v782 = vunpack.c.h.s8.bf16 %v502
        %v783 = vunpack.c.l.s8.bf16 %v503
        %v784 = vunpack.c.l.s8.bf16 %v504
        %v785 = vunpack.c.l.s8.bf16 %v505
        %v786 = vunpack.c.l.s8.bf16 %v506
        %v787 = vunpack.c.h.s8.bf16 %v503
        %v788 = vunpack.c.h.s8.bf16 %v504
        %v789 = vunpack.c.h.s8.bf16 %v505
        %v790 = vunpack.c.h.s8.bf16 %v506
        %v791 = vunpack.c.l.s8.bf16 %v507
        %v792 = vunpack.c.l.s8.bf16 %v508
        %v793 = vunpack.c.l.s8.bf16 %v509
        %v794 = vunpack.c.l.s8.bf16 %v510
        %v795 = vunpack.c.h.s8.bf16 %v507
        %v796 = vunpack.c.h.s8.bf16 %v508
        %v797 = vunpack.c.h.s8.bf16 %v509
        %v798 = vunpack.c.h.s8.bf16 %v510
        %v799 = vunpack.c.l.s8.bf16 %v511
        %v800 = vunpack.c.l.s8.bf16 %v512
        %v801 = vunpack.c.l.s8.bf16 %v513
        %v802 = vunpack.c.l.s8.bf16 %v514
        %v803 = vunpack.c.h.s8.bf16 %v511
        %v804 = vunpack.c.h.s8.bf16 %v512
        %v805 = vunpack.c.h.s8.bf16 %v513
        %v806 = vunpack.c.h.s8.bf16 %v514
        %v807 = vunpack.c.l.s8.bf16 %v515
        %v808 = vunpack.c.l.s8.bf16 %v516
        %v809 = vunpack.c.l.s8.bf16 %v517
        %v810 = vunpack.c.l.s8.bf16 %v518
        %v811 = vunpack.c.h.s8.bf16 %v515
        %v812 = vunpack.c.h.s8.bf16 %v516
        %v813 = vunpack.c.h.s8.bf16 %v517
        %v814 = vunpack.c.h.s8.bf16 %v518
        %v815 = vunpack.c.l.s8.bf16 %v519
        %v816 = vunpack.c.l.s8.bf16 %v520
        %v817 = vunpack.c.l.s8.bf16 %v521
        %v818 = vunpack.c.l.s8.bf16 %v522
        %v819 = vunpack.c.h.s8.bf16 %v519
        %v820 = vunpack.c.h.s8.bf16 %v520
        %v821 = vunpack.c.h.s8.bf16 %v521
        %v822 = vunpack.c.h.s8.bf16 %v522
        %v823 = vunpack.c.l.s8.bf16 %v523
        %v824 = vunpack.c.l.s8.bf16 %v524
        %v825 = vunpack.c.l.s8.bf16 %v525
        %v826 = vunpack.c.l.s8.bf16 %v526
        %v827 = vunpack.c.h.s8.bf16 %v523
        %v828 = vunpack.c.h.s8.bf16 %v524
        %v829 = vunpack.c.h.s8.bf16 %v525
        %v830 = vunpack.c.h.s8.bf16 %v526
        %v831 = vunpack.c.l.s8.bf16 %v527
        %v832 = vunpack.c.l.s8.bf16 %v528
        %v833 = vunpack.c.l.s8.bf16 %v529
        %v834 = vunpack.c.l.s8.bf16 %v530
        %v835 = vunpack.c.h.s8.bf16 %v527
        %v836 = vunpack.c.h.s8.bf16 %v528
        %v837 = vunpack.c.h.s8.bf16 %v529
        %v838 = vunpack.c.h.s8.bf16 %v530
        %v839 = vunpack.c.l.s8.bf16 %v531
        %v840 = vunpack.c.l.s8.bf16 %v532
        %v841 = vunpack.c.l.s8.bf16 %v533
        %v842 = vunpack.c.l.s8.bf16 %v534
        %v843 = vunpack.c.h.s8.bf16 %v531
        %v844 = vunpack.c.h.s8.bf16 %v532
        %v845 = vunpack.c.h.s8.bf16 %v533
        %v846 = vunpack.c.h.s8.bf16 %v534
        %v847 = vunpack.c.l.s8.bf16 %v535
        %v848 = vunpack.c.l.s8.bf16 %v536
        %v849 = vunpack.c.l.s8.bf16 %v537
        %v850 = vunpack.c.l.s8.bf16 %v538
        %v851 = vunpack.c.h.s8.bf16 %v535
        %v852 = vunpack.c.h.s8.bf16 %v536
        %v853 = vunpack.c.h.s8.bf16 %v537
        %v854 = vunpack.c.h.s8.bf16 %v538
        %v855 = vunpack.c.l.s8.bf16 %v539
        %v856 = vunpack.c.l.s8.bf16 %v540
        %v857 = vunpack.c.l.s8.bf16 %v541
        %v858 = vunpack.c.l.s8.bf16 %v542
        %v859 = vunpack.c.h.s8.bf16 %v539
        %v860 = vunpack.c.h.s8.bf16 %v540
        %v861 = vunpack.c.h.s8.bf16 %v541
        %v862 = vunpack.c.h.s8.bf16 %v542
        %v863 = vunpack.c.l.s8.bf16 %v543
        %v864 = vunpack.c.l.s8.bf16 %v544
        %v865 = vunpack.c.l.s8.bf16 %v545
        %v866 = vunpack.c.l.s8.bf16 %v546
        %v867 = vunpack.c.h.s8.bf16 %v543
        %v868 = vunpack.c.h.s8.bf16 %v544
        %v869 = vunpack.c.h.s8.bf16 %v545
        %v870 = vunpack.c.h.s8.bf16 %v546
        %v871 = vunpack.c.l.s8.bf16 %v547
        %v872 = vunpack.c.l.s8.bf16 %v548
        %v873 = vunpack.c.l.s8.bf16 %v549
        %v874 = vunpack.c.l.s8.bf16 %v550
        %v875 = vunpack.c.h.s8.bf16 %v547
        %v876 = vunpack.c.h.s8.bf16 %v548
        %v877 = vunpack.c.h.s8.bf16 %v549
        %v878 = vunpack.c.h.s8.bf16 %v550
        %v879 = vunpack.c.l.s8.bf16 %v551
        %v880 = vunpack.c.l.s8.bf16 %v552
        %v881 = vunpack.c.l.s8.bf16 %v553
        %v882 = vunpack.c.l.s8.bf16 %v554
        %v883 = vunpack.c.h.s8.bf16 %v551
        %v884 = vunpack.c.h.s8.bf16 %v552
        %v885 = vunpack.c.h.s8.bf16 %v553
        %v886 = vunpack.c.h.s8.bf16 %v554
        %v887 = vunpack.c.l.s8.bf16 %v555
        %v888 = vunpack.c.l.s8.bf16 %v556
        %v889 = vunpack.c.l.s8.bf16 %v557
        %v890 = vunpack.c.l.s8.bf16 %v558
        %v891 = vunpack.c.h.s8.bf16 %v555
        %v892 = vunpack.c.h.s8.bf16 %v556
        %v893 = vunpack.c.h.s8.bf16 %v557
        %v894 = vunpack.c.h.s8.bf16 %v558
        %v895 = vunpack.c.l.s8.bf16 %v559
        %v896 = vunpack.c.l.s8.bf16 %v560
        %v897 = vunpack.c.l.s8.bf16 %v561
        %v898 = vunpack.c.l.s8.bf16 %v562
        %v899 = vunpack.c.h.s8.bf16 %v559
        %v900 = vunpack.c.h.s8.bf16 %v560
        %v901 = vunpack.c.h.s8.bf16 %v561
        %v902 = vunpack.c.h.s8.bf16 %v562
        %v903 = vunpack.c.l.s8.bf16 %v563
        %v904 = vunpack.c.l.s8.bf16 %v564
        %v905 = vunpack.c.l.s8.bf16 %v565
        %v906 = vunpack.c.l.s8.bf16 %v566
        %v907 = vunpack.c.h.s8.bf16 %v563
        %v908 = vunpack.c.h.s8.bf16 %v564
        %v909 = vunpack.c.h.s8.bf16 %v565
        %v910 = vunpack.c.h.s8.bf16 %v566
        %v911 = vunpack.c.l.s8.bf16 %v567
        %v912 = vunpack.c.l.s8.bf16 %v568
        %v913 = vunpack.c.l.s8.bf16 %v569
        %v914 = vunpack.c.l.s8.bf16 %v570
        %v915 = vunpack.c.h.s8.bf16 %v567
        %v916 = vunpack.c.h.s8.bf16 %v568
        %v917 = vunpack.c.h.s8.bf16 %v569
        %v918 = vunpack.c.h.s8.bf16 %v570
        %v919 = vunpack.c.l.s8.bf16 %v571
        %v920 = vunpack.c.l.s8.bf16 %v572
        %v921 = vunpack.c.l.s8.bf16 %v573
        %v922 = vunpack.c.l.s8.bf16 %v574
        %v923 = vunpack.c.h.s8.bf16 %v571
        %v924 = vunpack.c.h.s8.bf16 %v572
        %v925 = vunpack.c.h.s8.bf16 %v573
        %v926 = vunpack.c.h.s8.bf16 %v574
        %v927 = vunpack.c.l.s8.bf16 %v575
        %v928 = vunpack.c.l.s8.bf16 %v576
        %v929 = vunpack.c.l.s8.bf16 %v577
        %v930 = vunpack.c.l.s8.bf16 %v578
        %v931 = vunpack.c.h.s8.bf16 %v575
        %v932 = vunpack.c.h.s8.bf16 %v576
        %v933 = vunpack.c.h.s8.bf16 %v577
        %v934 = vunpack.c.h.s8.bf16 %v578
        %v935 = vunpack.c.l.s8.bf16 %v579
        %v936 = vunpack.c.l.s8.bf16 %v580
        %v937 = vunpack.c.l.s8.bf16 %v581
        %v938 = vunpack.c.l.s8.bf16 %v582
        %v939 = vunpack.c.h.s8.bf16 %v579
        %v940 = vunpack.c.h.s8.bf16 %v580
        %v941 = vunpack.c.h.s8.bf16 %v581
        %v942 = vunpack.c.h.s8.bf16 %v582
        %v943 = vunpack.c.l.s8.bf16 %v583
        %v944 = vunpack.c.l.s8.bf16 %v584
        %v945 = vunpack.c.l.s8.bf16 %v585
        %v946 = vunpack.c.l.s8.bf16 %v586
        %v947 = vunpack.c.h.s8.bf16 %v583
        %v948 = vunpack.c.h.s8.bf16 %v584
        %v949 = vunpack.c.h.s8.bf16 %v585
        %v950 = vunpack.c.h.s8.bf16 %v586
        %v951 = vunpack.c.l.s8.bf16 %v587
        %v952 = vunpack.c.l.s8.bf16 %v588
        %v953 = vunpack.c.l.s8.bf16 %v589
        %v954 = vunpack.c.l.s8.bf16 %v590
        %v955 = vunpack.c.h.s8.bf16 %v587
        %v956 = vunpack.c.h.s8.bf16 %v588
        %v957 = vunpack.c.h.s8.bf16 %v589
        %v958 = vunpack.c.h.s8.bf16 %v590
        %v959 = vunpack.c.l.s8.bf16 %v591
        %v960 = vunpack.c.l.s8.bf16 %v592
        %v961 = vunpack.c.l.s8.bf16 %v593
        %v962 = vunpack.c.l.s8.bf16 %v594
        %v963 = vunpack.c.h.s8.bf16 %v591
        %v964 = vunpack.c.h.s8.bf16 %v592
        %v965 = vunpack.c.h.s8.bf16 %v593
        %v966 = vunpack.c.h.s8.bf16 %v594
        %v967 = vunpack.c.l.s8.bf16 %v595
        %v968 = vunpack.c.l.s8.bf16 %v596
        %v969 = vunpack.c.l.s8.bf16 %v597
        %v970 = vunpack.c.l.s8.bf16 %v598
        %v971 = vunpack.c.h.s8.bf16 %v595
        %v972 = vunpack.c.h.s8.bf16 %v596
        %v973 = vunpack.c.h.s8.bf16 %v597
        %v974 = vunpack.c.h.s8.bf16 %v598
        %v975 = vunpack.c.l.s8.bf16 %v599
        %v976 = vunpack.c.l.s8.bf16 %v600
        %v977 = vunpack.c.l.s8.bf16 %v601
        %v978 = vunpack.c.l.s8.bf16 %v602
        %v979 = vunpack.c.h.s8.bf16 %v599
        %v980 = vunpack.c.h.s8.bf16 %v600
        %v981 = vunpack.c.h.s8.bf16 %v601
        %v982 = vunpack.c.h.s8.bf16 %v602
        %v983 = vunpack.c.l.s8.bf16 %v603
        %v984 = vunpack.c.l.s8.bf16 %v604
        %v985 = vunpack.c.l.s8.bf16 %v605
        %v986 = vunpack.c.l.s8.bf16 %v606
        %v987 = vunpack.c.h.s8.bf16 %v603
        %v988 = vunpack.c.h.s8.bf16 %v604
        %v989 = vunpack.c.h.s8.bf16 %v605
        %v990 = vunpack.c.h.s8.bf16 %v606
        %v991 = vunpack.c.l.s8.bf16 %v607
        %v992 = vunpack.c.l.s8.bf16 %v608
        %v993 = vunpack.c.l.s8.bf16 %v609
        %v994 = vunpack.c.l.s8.bf16 %v610
        %v995 = vunpack.c.h.s8.bf16 %v607
        %v996 = vunpack.c.h.s8.bf16 %v608
        %v997 = vunpack.c.h.s8.bf16 %v609
        %v998 = vunpack.c.h.s8.bf16 %v610
        %v999 = vunpack.c.l.s8.bf16 %v611
        %v1000 = vunpack.c.l.s8.bf16 %v612
        %v1001 = vunpack.c.l.s8.bf16 %v613
        %v1002 = vunpack.c.l.s8.bf16 %v614
        %v1003 = vunpack.c.h.s8.bf16 %v611
        %v1004 = vunpack.c.h.s8.bf16 %v612
        %v1005 = vunpack.c.h.s8.bf16 %v613
        %v1006 = vunpack.c.h.s8.bf16 %v614
        %v1007 = vunpack.c.l.s8.bf16 %v615
        %v1008 = vunpack.c.l.s8.bf16 %v616
        %v1009 = vunpack.c.l.s8.bf16 %v617
        %v1010 = vunpack.c.l.s8.bf16 %v618
        %v1011 = vunpack.c.h.s8.bf16 %v615
        %v1012 = vunpack.c.h.s8.bf16 %v616
        %v1013 = vunpack.c.h.s8.bf16 %v617
        %v1014 = vunpack.c.h.s8.bf16 %v618
        %v1015 = vunpack.c.l.s8.bf16 %v619
        %v1016 = vunpack.c.l.s8.bf16 %v620
        %v1017 = vunpack.c.l.s8.bf16 %v621
        %v1018 = vunpack.c.l.s8.bf16 %v622
        %v1019 = vunpack.c.h.s8.bf16 %v619
        %v1020 = vunpack.c.h.s8.bf16 %v620
        %v1021 = vunpack.c.h.s8.bf16 %v621
        %v1022 = vunpack.c.h.s8.bf16 %v622
        %v1023 = vunpack.c.l.s8.bf16 %v623
        %v1024 = vunpack.c.l.s8.bf16 %v624
        %v1025 = vunpack.c.l.s8.bf16 %v625
        %v1026 = vunpack.c.l.s8.bf16 %v626
        %v1027 = vunpack.c.h.s8.bf16 %v623
        %v1028 = vunpack.c.h.s8.bf16 %v624
        %v1029 = vunpack.c.h.s8.bf16 %v625
        %v1030 = vunpack.c.h.s8.bf16 %v626
        %v1031 = vunpack.c.l.s8.bf16 %v627
        %v1032 = vunpack.c.l.s8.bf16 %v628
        %v1033 = vunpack.c.l.s8.bf16 %v629
        %v1034 = vunpack.c.l.s8.bf16 %v630
        %v1035 = vunpack.c.h.s8.bf16 %v627
        %v1036 = vunpack.c.h.s8.bf16 %v628
        %v1037 = vunpack.c.h.s8.bf16 %v629
        %v1038 = vunpack.c.h.s8.bf16 %v630
        %v1039 = vunpack.c.l.s8.bf16 %v631
        %v1040 = vunpack.c.l.s8.bf16 %v632
        %v1041 = vunpack.c.l.s8.bf16 %v633
        %v1042 = vunpack.c.l.s8.bf16 %v634
        %v1043 = vunpack.c.h.s8.bf16 %v631
        %v1044 = vunpack.c.h.s8.bf16 %v632
        %v1045 = vunpack.c.h.s8.bf16 %v633
        %v1046 = vunpack.c.h.s8.bf16 %v634
        %v1047 = vunpack.c.l.s8.bf16 %v635
        %v1048 = vunpack.c.l.s8.bf16 %v636
        %v1049 = vunpack.c.l.s8.bf16 %v637
        %v1050 = vunpack.c.l.s8.bf16 %v638
        %v1051 = vunpack.c.h.s8.bf16 %v635
        %v1052 = vunpack.c.h.s8.bf16 %v636
        %v1053 = vunpack.c.h.s8.bf16 %v637
        %v1054 = vunpack.c.h.s8.bf16 %v638
        %v1055 = vunpack.c.l.s8.bf16 %v639
        %v1056 = vunpack.c.l.s8.bf16 %v640
        %v1057 = vunpack.c.l.s8.bf16 %v641
        %v1058 = vunpack.c.l.s8.bf16 %v642
        %v1059 = vunpack.c.h.s8.bf16 %v639
        %v1060 = vunpack.c.h.s8.bf16 %v640
        %v1061 = vunpack.c.h.s8.bf16 %v641
        %v1062 = vunpack.c.h.s8.bf16 %v642
        %v1063 = vunpack.c.l.s8.bf16 %v643
        %v1064 = vunpack.c.l.s8.bf16 %v644
        %v1065 = vunpack.c.l.s8.bf16 %v645
        %v1066 = vunpack.c.l.s8.bf16 %v646
        %v1067 = vunpack.c.h.s8.bf16 %v643
        %v1068 = vunpack.c.h.s8.bf16 %v644
        %v1069 = vunpack.c.h.s8.bf16 %v645
        %v1070 = vunpack.c.h.s8.bf16 %v646
        %v1071 = vunpack.c.l.s8.bf16 %v647
        %v1072 = vunpack.c.l.s8.bf16 %v648
        %v1073 = vunpack.c.l.s8.bf16 %v649
        %v1074 = vunpack.c.l.s8.bf16 %v650
        %v1075 = vunpack.c.h.s8.bf16 %v647
        %v1076 = vunpack.c.h.s8.bf16 %v648
        %v1077 = vunpack.c.h.s8.bf16 %v649
        %v1078 = vunpack.c.h.s8.bf16 %v650
        %v1079 = vunpack.c.l.s8.bf16 %v651
        %v1080 = vunpack.c.l.s8.bf16 %v652
        %v1081 = vunpack.c.l.s8.bf16 %v653
        %v1082 = vunpack.c.l.s8.bf16 %v654
        %v1083 = vunpack.c.h.s8.bf16 %v651
        %v1084 = vunpack.c.h.s8.bf16 %v652
        %v1085 = vunpack.c.h.s8.bf16 %v653
        %v1086 = vunpack.c.h.s8.bf16 %v654
        %v1087 = vunpack.c.l.s8.bf16 %v655
        %v1088 = vunpack.c.l.s8.bf16 %v656
        %v1089 = vunpack.c.l.s8.bf16 %v657
        %v1090 = vunpack.c.l.s8.bf16 %v658
        %v1091 = vunpack.c.h.s8.bf16 %v655
        %v1092 = vunpack.c.h.s8.bf16 %v656
        %v1093 = vunpack.c.h.s8.bf16 %v657
        %v1094 = vunpack.c.h.s8.bf16 %v658
        %v1095 = vunpack.c.l.s8.bf16 %v659
        %v1096 = vunpack.c.l.s8.bf16 %v660
        %v1097 = vunpack.c.l.s8.bf16 %v661
        %v1098 = vunpack.c.l.s8.bf16 %v662
        %v1099 = vunpack.c.h.s8.bf16 %v659
        %v1100 = vunpack.c.h.s8.bf16 %v660
        %v1101 = vunpack.c.h.s8.bf16 %v661
        %v1102 = vunpack.c.h.s8.bf16 %v662
        %v1103 = vunpack.c.l.s8.bf16 %v663
        %v1104 = vunpack.c.l.s8.bf16 %v664
        %v1105 = vunpack.c.l.s8.bf16 %v665
        %v1106 = vunpack.c.l.s8.bf16 %v666
        %v1107 = vunpack.c.h.s8.bf16 %v663
        %v1108 = vunpack.c.h.s8.bf16 %v664
        %v1109 = vunpack.c.h.s8.bf16 %v665
        %v1110 = vunpack.c.h.s8.bf16 %v666
        %v1111 = vunpack.c.l.s8.bf16 %v667
        %v1112 = vunpack.c.l.s8.bf16 %v668
        %v1113 = vunpack.c.l.s8.bf16 %v669
        %v1114 = vunpack.c.l.s8.bf16 %v670
        %v1115 = vunpack.c.h.s8.bf16 %v667
        %v1116 = vunpack.c.h.s8.bf16 %v668
        %v1117 = vunpack.c.h.s8.bf16 %v669
        %v1118 = vunpack.c.h.s8.bf16 %v670
        %v1119 = vunpack.c.l.s8.bf16 %v671
        %v1120 = vunpack.c.l.s8.bf16 %v672
        %v1121 = vunpack.c.l.s8.bf16 %v673
        %v1122 = vunpack.c.l.s8.bf16 %v674
        %v1123 = vunpack.c.h.s8.bf16 %v671
        %v1124 = vunpack.c.h.s8.bf16 %v672
        %v1125 = vunpack.c.h.s8.bf16 %v673
        %v1126 = vunpack.c.h.s8.bf16 %v674
        %v1127 = vunpack.c.l.s8.bf16 %v675
        %v1128 = vunpack.c.l.s8.bf16 %v676
        %v1129 = vunpack.c.l.s8.bf16 %v677
        %v1130 = vunpack.c.l.s8.bf16 %v678
        %v1131 = vunpack.c.h.s8.bf16 %v675
        %v1132 = vunpack.c.h.s8.bf16 %v676
        %v1133 = vunpack.c.h.s8.bf16 %v677
        %v1134 = vunpack.c.h.s8.bf16 %v678
        %v1135 = vunpack.c.l.s8.bf16 %v679
        %v1136 = vunpack.c.l.s8.bf16 %v680
        %v1137 = vunpack.c.l.s8.bf16 %v681
        %v1138 = vunpack.c.l.s8.bf16 %v682
        %v1139 = vunpack.c.h.s8.bf16 %v679
        %v1140 = vunpack.c.h.s8.bf16 %v680
        %v1141 = vunpack.c.h.s8.bf16 %v681
        %v1142 = vunpack.c.h.s8.bf16 %v682
        %v1143 = vunpack.c.l.s8.bf16 %v683
        %v1144 = vunpack.c.l.s8.bf16 %v684
        %v1145 = vunpack.c.l.s8.bf16 %v685
        %v1146 = vunpack.c.l.s8.bf16 %v686
        %v1147 = vunpack.c.h.s8.bf16 %v683
        %v1148 = vunpack.c.h.s8.bf16 %v684
        %v1149 = vunpack.c.h.s8.bf16 %v685
        %v1150 = vunpack.c.h.s8.bf16 %v686
        %v1151 = vunpack.c.l.s8.bf16 %v687
        %v1152 = vunpack.c.l.s8.bf16 %v688
        %v1153 = vunpack.c.l.s8.bf16 %v689
        %v1154 = vunpack.c.l.s8.bf16 %v690
        %v1155 = vunpack.c.h.s8.bf16 %v687
        %v1156 = vunpack.c.h.s8.bf16 %v688
        %v1157 = vunpack.c.h.s8.bf16 %v689
        %v1158 = vunpack.c.h.s8.bf16 %v690
        %v1159 = vunpack.c.l.s8.bf16 %v691
        %v1160 = vunpack.c.l.s8.bf16 %v692
        %v1161 = vunpack.c.l.s8.bf16 %v693
        %v1162 = vunpack.c.l.s8.bf16 %v694
        %v1163 = vunpack.c.h.s8.bf16 %v691
        %v1164 = vunpack.c.h.s8.bf16 %v692
        %v1165 = vunpack.c.h.s8.bf16 %v693
        %v1166 = vunpack.c.h.s8.bf16 %v694
        %v1167 = vunpack.c.l.s8.bf16 %v695
        %v1168 = vunpack.c.l.s8.bf16 %v696
        %v1169 = vunpack.c.l.s8.bf16 %v697
        %v1170 = vunpack.c.l.s8.bf16 %v698
        %v1171 = vunpack.c.h.s8.bf16 %v695
        %v1172 = vunpack.c.h.s8.bf16 %v696
        %v1173 = vunpack.c.h.s8.bf16 %v697
        %v1174 = vunpack.c.h.s8.bf16 %v698
        %v1175 = vunpack.c.l.s8.bf16 %v699
        %v1176 = vunpack.c.l.s8.bf16 %v700
        %v1177 = vunpack.c.l.s8.bf16 %v701
        %v1178 = vunpack.c.l.s8.bf16 %v702
        %v1179 = vunpack.c.h.s8.bf16 %v699
        %v1180 = vunpack.c.h.s8.bf16 %v700
        %v1181 = vunpack.c.h.s8.bf16 %v701
        %v1182 = vunpack.c.h.s8.bf16 %v702
        %v1183 = vunpack.c.l.s8.bf16 %v703
        %v1184 = vunpack.c.l.s8.bf16 %v704
        %v1185 = vunpack.c.l.s8.bf16 %v705
        %v1186 = vunpack.c.l.s8.bf16 %v706
        %v1187 = vunpack.c.h.s8.bf16 %v703
        %v1188 = vunpack.c.h.s8.bf16 %v704
        %v1189 = vunpack.c.h.s8.bf16 %v705
        %v1190 = vunpack.c.h.s8.bf16 %v706
        %v1191 = vunpack.c.l.s8.bf16 %v707
        %v1192 = vunpack.c.l.s8.bf16 %v708
        %v1193 = vunpack.c.l.s8.bf16 %v709
        %v1194 = vunpack.c.l.s8.bf16 %v710
        %v1195 = vunpack.c.h.s8.bf16 %v707
        %v1196 = vunpack.c.h.s8.bf16 %v708
        %v1197 = vunpack.c.h.s8.bf16 %v709
        %v1198 = vunpack.c.h.s8.bf16 %v710
        %v1199 = vunpack.c.l.s8.bf16 %v711
        %v1200 = vunpack.c.l.s8.bf16 %v712
        %v1201 = vunpack.c.l.s8.bf16 %v713
        %v1202 = vunpack.c.l.s8.bf16 %v714
        %v1203 = vunpack.c.h.s8.bf16 %v711
        %v1204 = vunpack.c.h.s8.bf16 %v712
        %v1205 = vunpack.c.h.s8.bf16 %v713
        %v1206 = vunpack.c.h.s8.bf16 %v714
        %v1207 = vunpack.c.l.s8.bf16 %v715
        %v1208 = vunpack.c.l.s8.bf16 %v716
        %v1209 = vunpack.c.l.s8.bf16 %v717
        %v1210 = vunpack.c.l.s8.bf16 %v718
        %v1211 = vunpack.c.h.s8.bf16 %v715
        %v1212 = vunpack.c.h.s8.bf16 %v716
        %v1213 = vunpack.c.h.s8.bf16 %v717
        %v1214 = vunpack.c.h.s8.bf16 %v718
        %v1215 = vunpack.c.l.s8.bf16 %v719
        %v1216 = vunpack.c.l.s8.bf16 %v720
        %v1217 = vunpack.c.l.s8.bf16 %v721
        %v1218 = vunpack.c.l.s8.bf16 %v722
        %v1219 = vunpack.c.h.s8.bf16 %v719
        %v1220 = vunpack.c.h.s8.bf16 %v720
        %v1221 = vunpack.c.h.s8.bf16 %v721
        %v1222 = vunpack.c.h.s8.bf16 %v722
        %v1223 = vunpack.c.l.s8.bf16 %v723
        %v1224 = vunpack.c.l.s8.bf16 %v724
        %v1225 = vunpack.c.l.s8.bf16 %v725
        %v1226 = vunpack.c.l.s8.bf16 %v726
        %v1227 = vunpack.c.h.s8.bf16 %v723
        %v1228 = vunpack.c.h.s8.bf16 %v724
        %v1229 = vunpack.c.h.s8.bf16 %v725
        %v1230 = vunpack.c.h.s8.bf16 %v726
        %v1231 = vunpack.c.l.s8.bf16 %v727
        %v1232 = vunpack.c.l.s8.bf16 %v728
        %v1233 = vunpack.c.l.s8.bf16 %v729
        %v1234 = vunpack.c.l.s8.bf16 %v730
        %v1235 = vunpack.c.h.s8.bf16 %v727
        %v1236 = vunpack.c.h.s8.bf16 %v728
        %v1237 = vunpack.c.h.s8.bf16 %v729
        %v1238 = vunpack.c.h.s8.bf16 %v730
        %v1239 = vunpack.c.l.s8.bf16 %v731
        %v1240 = vunpack.c.l.s8.bf16 %v732
        %v1241 = vunpack.c.l.s8.bf16 %v733
        %v1242 = vunpack.c.l.s8.bf16 %v734
        %v1243 = vunpack.c.h.s8.bf16 %v731
        %v1244 = vunpack.c.h.s8.bf16 %v732
        %v1245 = vunpack.c.h.s8.bf16 %v733
        %v1246 = vunpack.c.h.s8.bf16 %v734
        %1247 = vmatprep.subr.bf16.mxu0 %v736
        %1248 = vmatpush1.bf16.msra.mxu0 %v735
        %1249 = vmatprep.subr.bf16.mxu0 %v740
        %1250 = vmatpush1.bf16.msra.mxu0 %v739
        %1251 = vmatprep.subr.bf16.mxu0 %v744
        %1252 = vmatpush1.bf16.msra.mxu0 %v743
        %1253 = vmatprep.subr.bf16.mxu0 %v748
        %1254 = vmatpush1.bf16.msra.mxu0 %v747
        %1255 = vmatprep.subr.bf16.mxu0 %v752
        %1256 = vmatpush1.bf16.msra.mxu0 %v751
        %1257 = vmatprep.subr.bf16.mxu0 %v756
        %1258 = vmatpush1.bf16.msra.mxu0 %v755
        %1259 = vmatprep.subr.bf16.mxu0 %v760
        %1260 = vmatpush1.bf16.msra.mxu0 %v759
        %1261 = vmatprep.subr.bf16.mxu0 %v764
        %1262 = vmatpush1.bf16.msra.mxu0 %v763
        %1263 = vmatprep.subr.bf16.mxu0 %v768
        %1264 = vmatpush1.bf16.msra.mxu0 %v767
        %1265 = vmatprep.subr.bf16.mxu0 %v772
        %1266 = vmatpush1.bf16.msra.mxu0 %v771
        %1267 = vmatprep.subr.bf16.mxu0 %v776
        %1268 = vmatpush1.bf16.msra.mxu0 %v775
        %1269 = vmatprep.subr.bf16.mxu0 %v780
        %1270 = vmatpush1.bf16.msra.mxu0 %v779
        %1271 = vmatprep.subr.bf16.mxu0 %v784
        %1272 = vmatpush1.bf16.msra.mxu0 %v783
        %1273 = vmatprep.subr.bf16.mxu0 %v788
        %1274 = vmatpush1.bf16.msra.mxu0 %v787
        %1275 = vmatprep.subr.bf16.mxu0 %v792
        %1276 = vmatpush1.bf16.msra.mxu0 %v791
        %1277 = vmatprep.subr.bf16.mxu0 %v796
        %1278 = vmatpush1.bf16.msra.mxu0 %v795
        %1279 = vmatprep.mubr.bf16.mxu0 %v464
        %1280 = vmatmul.mubr.bf16.gmra.mrb[0].mxu0 %v463
        %v1281 = vpop.f32.mrb[0].mxu0
        %v1282 = vadd.f32 0.0, %v1281
        %v1283 = vpop.f32.mrb[0].mxu0
        %v1284 = vadd.f32 0.0, %v1283
        %v1285 = vpop.f32.mrb[0].mxu0
        %v1286 = vpop.f32.mrb[0].mxu0
        %1287 = vdwg.mxu0
        %1288 = vmatprep.subr.bf16.mxu0 %v800
        %1289 = vmatpush1.bf16.msra.mxu0 %v799
        %1290 = vmatprep.subr.bf16.mxu0 %v804
        %1291 = vmatpush1.bf16.msra.mxu0 %v803
        %1292 = vmatprep.subr.bf16.mxu0 %v808
        %1293 = vmatpush1.bf16.msra.mxu0 %v807
        %1294 = vmatprep.subr.bf16.mxu0 %v812
        %1295 = vmatpush1.bf16.msra.mxu0 %v811
        %1296 = vmatprep.subr.bf16.mxu0 %v816
        %1297 = vmatpush1.bf16.msra.mxu0 %v815
        %1298 = vmatprep.subr.bf16.mxu0 %v820
        %1299 = vmatpush1.bf16.msra.mxu0 %v819
        %1300 = vmatprep.subr.bf16.mxu0 %v824
        %1301 = vmatpush1.bf16.msra.mxu0 %v823
        %1302 = vmatprep.subr.bf16.mxu0 %v828
        %1303 = vmatpush1.bf16.msra.mxu0 %v827
        %1304 = vmatprep.subr.bf16.mxu0 %v832
        %1305 = vmatpush1.bf16.msra.mxu0 %v831
        %1306 = vmatprep.subr.bf16.mxu0 %v836
        %1307 = vmatpush1.bf16.msra.mxu0 %v835
        %1308 = vmatprep.subr.bf16.mxu0 %v840
        %1309 = vmatpush1.bf16.msra.mxu0 %v839
        %1310 = vmatprep.subr.bf16.mxu0 %v844
        %1311 = vmatpush1.bf16.msra.mxu0 %v843
        %1312 = vmatprep.subr.bf16.mxu0 %v848
        %1313 = vmatpush1.bf16.msra.mxu0 %v847
        %1314 = vmatprep.subr.bf16.mxu0 %v852
        %1315 = vmatpush1.bf16.msra.mxu0 %v851
        %1316 = vmatprep.subr.bf16.mxu0 %v856
        %1317 = vmatpush1.bf16.msra.mxu0 %v855
        %1318 = vmatprep.subr.bf16.mxu0 %v860
        %1319 = vmatpush1.bf16.msra.mxu0 %v859
        %1320 = vmatprep.mubr.bf16.mxu0 %v466
        %1321 = vmatmul.mubr.bf16.gmra.mrb[0].mxu0 %v465
        %v1322 = vpop.f32.mrb[0].mxu0
        %v1323 = vadd.f32 %v1282, %v1322
        %v1324 = vpop.f32.mrb[0].mxu0
        %v1325 = vadd.f32 %v1284, %v1324
        %v1326 = vpop.f32.mrb[0].mxu0
        %v1327 = vpop.f32.mrb[0].mxu0
        %1328 = vdwg.mxu0
        %1329 = vmatprep.subr.bf16.mxu0 %v864
        %1330 = vmatpush1.bf16.msra.mxu0 %v863
        %1331 = vmatprep.subr.bf16.mxu0 %v868
        %1332 = vmatpush1.bf16.msra.mxu0 %v867
        %1333 = vmatprep.subr.bf16.mxu0 %v872
        %1334 = vmatpush1.bf16.msra.mxu0 %v871
        %1335 = vmatprep.subr.bf16.mxu0 %v876
        %1336 = vmatpush1.bf16.msra.mxu0 %v875
        %1337 = vmatprep.subr.bf16.mxu0 %v880
        %1338 = vmatpush1.bf16.msra.mxu0 %v879
        %1339 = vmatprep.subr.bf16.mxu0 %v884
        %1340 = vmatpush1.bf16.msra.mxu0 %v883
        %1341 = vmatprep.subr.bf16.mxu0 %v888
        %1342 = vmatpush1.bf16.msra.mxu0 %v887
        %1343 = vmatprep.subr.bf16.mxu0 %v892
        %1344 = vmatpush1.bf16.msra.mxu0 %v891
        %1345 = vmatprep.subr.bf16.mxu0 %v896
        %1346 = vmatpush1.bf16.msra.mxu0 %v895
        %1347 = vmatprep.subr.bf16.mxu0 %v900
        %1348 = vmatpush1.bf16.msra.mxu0 %v899
        %1349 = vmatprep.subr.bf16.mxu0 %v904
        %1350 = vmatpush1.bf16.msra.mxu0 %v903
        %1351 = vmatprep.subr.bf16.mxu0 %v908
        %1352 = vmatpush1.bf16.msra.mxu0 %v907
        %1353 = vmatprep.subr.bf16.mxu0 %v912
        %1354 = vmatpush1.bf16.msra.mxu0 %v911
        %1355 = vmatprep.subr.bf16.mxu0 %v916
        %1356 = vmatpush1.bf16.msra.mxu0 %v915
        %1357 = vmatprep.subr.bf16.mxu0 %v920
        %1358 = vmatpush1.bf16.msra.mxu0 %v919
        %1359 = vmatprep.subr.bf16.mxu0 %v924
        %1360 = vmatpush1.bf16.msra.mxu0 %v923
        %1361 = vmatprep.mubr.bf16.mxu0 %v468
        %1362 = vmatmul.mubr.bf16.gmra.mrb[0].mxu0 %v467
        %v1363 = vpop.f32.mrb[0].mxu0
        %v1364 = vadd.f32 %v1323, %v1363
        %v1365 = vpop.f32.mrb[0].mxu0
        %v1366 = vadd.f32 %v1325, %v1365
        %v1367 = vpop.f32.mrb[0].mxu0
        %v1368 = vpop.f32.mrb[0].mxu0
        %1369 = vdwg.mxu0
        %1370 = vmatprep.subr.bf16.mxu0 %v928
        %1371 = vmatpush1.bf16.msra.mxu0 %v927
        %1372 = vmatprep.subr.bf16.mxu0 %v932
        %1373 = vmatpush1.bf16.msra.mxu0 %v931
        %1374 = vmatprep.subr.bf16.mxu0 %v936
        %1375 = vmatpush1.bf16.msra.mxu0 %v935
        %1376 = vmatprep.subr.bf16.mxu0 %v940
        %1377 = vmatpush1.bf16.msra.mxu0 %v939
        %1378 = vmatprep.subr.bf16.mxu0 %v944
        %1379 = vmatpush1.bf16.msra.mxu0 %v943
        %1380 = vmatprep.subr.bf16.mxu0 %v948
        %1381 = vmatpush1.bf16.msra.mxu0 %v947
        %1382 = vmatprep.subr.bf16.mxu0 %v952
        %1383 = vmatpush1.bf16.msra.mxu0 %v951
        %1384 = vmatprep.subr.bf16.mxu0 %v956
        %1385 = vmatpush1.bf16.msra.mxu0 %v955
        %1386 = vmatprep.subr.bf16.mxu0 %v960
        %1387 = vmatpush1.bf16.msra.mxu0 %v959
        %1388 = vmatprep.subr.bf16.mxu0 %v964
        %1389 = vmatpush1.bf16.msra.mxu0 %v963
        %1390 = vmatprep.subr.bf16.mxu0 %v968
        %1391 = vmatpush1.bf16.msra.mxu0 %v967
        %1392 = vmatprep.subr.bf16.mxu0 %v972
        %1393 = vmatpush1.bf16.msra.mxu0 %v971
        %1394 = vmatprep.subr.bf16.mxu0 %v976
        %1395 = vmatpush1.bf16.msra.mxu0 %v975
        %1396 = vmatprep.subr.bf16.mxu0 %v980
        %1397 = vmatpush1.bf16.msra.mxu0 %v979
        %1398 = vmatprep.subr.bf16.mxu0 %v984
        %1399 = vmatpush1.bf16.msra.mxu0 %v983
        %1400 = vmatprep.subr.bf16.mxu0 %v988
        %1401 = vmatpush1.bf16.msra.mxu0 %v987
        %1402 = vmatprep.mubr.bf16.mxu0 %v470
        %1403 = vmatmul.mubr.bf16.gmra.mrb[0].mxu0 %v469
        %v1404 = vpop.f32.mrb[0].mxu0
        %v1405 = vadd.f32 %v1364, %v1404
        %v1406 = vpop.f32.mrb[0].mxu0
        %v1407 = vadd.f32 %v1366, %v1406
        %v1408 = vpop.f32.mrb[0].mxu0
        %v1409 = vpop.f32.mrb[0].mxu0
        %1410 = vdwg.mxu0
        %1411 = vmatprep.subr.bf16.mxu0 %v992
        %1412 = vmatpush1.bf16.msra.mxu0 %v991
        %1413 = vmatprep.subr.bf16.mxu0 %v996
        %1414 = vmatpush1.bf16.msra.mxu0 %v995
        %1415 = vmatprep.subr.bf16.mxu0 %v1000
        %1416 = vmatpush1.bf16.msra.mxu0 %v999
        %1417 = vmatprep.subr.bf16.mxu0 %v1004
        %1418 = vmatpush1.bf16.msra.mxu0 %v1003
        %1419 = vmatprep.subr.bf16.mxu0 %v1008
        %1420 = vmatpush1.bf16.msra.mxu0 %v1007
        %1421 = vmatprep.subr.bf16.mxu0 %v1012
        %1422 = vmatpush1.bf16.msra.mxu0 %v1011
        %1423 = vmatprep.subr.bf16.mxu0 %v1016
        %1424 = vmatpush1.bf16.msra.mxu0 %v1015
        %1425 = vmatprep.subr.bf16.mxu0 %v1020
        %1426 = vmatpush1.bf16.msra.mxu0 %v1019
        %1427 = vmatprep.subr.bf16.mxu0 %v1024
        %1428 = vmatpush1.bf16.msra.mxu0 %v1023
        %1429 = vmatprep.subr.bf16.mxu0 %v1028
        %1430 = vmatpush1.bf16.msra.mxu0 %v1027
        %1431 = vmatprep.subr.bf16.mxu0 %v1032
        %1432 = vmatpush1.bf16.msra.mxu0 %v1031
        %1433 = vmatprep.subr.bf16.mxu0 %v1036
        %1434 = vmatpush1.bf16.msra.mxu0 %v1035
        %1435 = vmatprep.subr.bf16.mxu0 %v1040
        %1436 = vmatpush1.bf16.msra.mxu0 %v1039
        %1437 = vmatprep.subr.bf16.mxu0 %v1044
        %1438 = vmatpush1.bf16.msra.mxu0 %v1043
        %1439 = vmatprep.subr.bf16.mxu0 %v1048
        %1440 = vmatpush1.bf16.msra.mxu0 %v1047
        %1441 = vmatprep.subr.bf16.mxu0 %v1052
        %1442 = vmatpush1.bf16.msra.mxu0 %v1051
        %1443 = vmatprep.mubr.bf16.mxu0 %v472
        %1444 = vmatmul.mubr.bf16.gmra.mrb[0].mxu0 %v471
        %v1445 = vpop.f32.mrb[0].mxu0
        %v1446 = vadd.f32 %v1405, %v1445
        %v1447 = vpop.f32.mrb[0].mxu0
        %v1448 = vadd.f32 %v1407, %v1447
        %v1449 = vpop.f32.mrb[0].mxu0
        %v1450 = vpop.f32.mrb[0].mxu0
        %1451 = vdwg.mxu0
        %1452 = vmatprep.subr.bf16.mxu0 %v1056
        %1453 = vmatpush1.bf16.msra.mxu0 %v1055
        %1454 = vmatprep.subr.bf16.mxu0 %v1060
        %1455 = vmatpush1.bf16.msra.mxu0 %v1059
        %1456 = vmatprep.subr.bf16.mxu0 %v1064
        %1457 = vmatpush1.bf16.msra.mxu0 %v1063
        %1458 = vmatprep.subr.bf16.mxu0 %v1068
        %1459 = vmatpush1.bf16.msra.mxu0 %v1067
        %1460 = vmatprep.subr.bf16.mxu0 %v1072
        %1461 = vmatpush1.bf16.msra.mxu0 %v1071
        %1462 = vmatprep.subr.bf16.mxu0 %v1076
        %1463 = vmatpush1.bf16.msra.mxu0 %v1075
        %1464 = vmatprep.subr.bf16.mxu0 %v1080
        %1465 = vmatpush1.bf16.msra.mxu0 %v1079
        %1466 = vmatprep.subr.bf16.mxu0 %v1084
        %1467 = vmatpush1.bf16.msra.mxu0 %v1083
        %1468 = vmatprep.subr.bf16.mxu0 %v1088
        %1469 = vmatpush1.bf16.msra.mxu0 %v1087
        %1470 = vmatprep.subr.bf16.mxu0 %v1092
        %1471 = vmatpush1.bf16.msra.mxu0 %v1091
        %1472 = vmatprep.subr.bf16.mxu0 %v1096
        %1473 = vmatpush1.bf16.msra.mxu0 %v1095
        %1474 = vmatprep.subr.bf16.mxu0 %v1100
        %1475 = vmatpush1.bf16.msra.mxu0 %v1099
        %1476 = vmatprep.subr.bf16.mxu0 %v1104
        %1477 = vmatpush1.bf16.msra.mxu0 %v1103
        %1478 = vmatprep.subr.bf16.mxu0 %v1108
        %1479 = vmatpush1.bf16.msra.mxu0 %v1107
        %1480 = vmatprep.subr.bf16.mxu0 %v1112
        %1481 = vmatpush1.bf16.msra.mxu0 %v1111
        %1482 = vmatprep.subr.bf16.mxu0 %v1116
        %1483 = vmatpush1.bf16.msra.mxu0 %v1115
        %1484 = vmatprep.mubr.bf16.mxu0 %v474
        %1485 = vmatmul.mubr.bf16.gmra.mrb[0].mxu0 %v473
        %v1486 = vpop.f32.mrb[0].mxu0
        %v1487 = vadd.f32 %v1446, %v1486
        %v1488 = vpop.f32.mrb[0].mxu0
        %v1489 = vadd.f32 %v1448, %v1488
        %v1490 = vpop.f32.mrb[0].mxu0
        %v1491 = vpop.f32.mrb[0].mxu0
        %1492 = vdwg.mxu0
        %1493 = vmatprep.subr.bf16.mxu0 %v1120
        %1494 = vmatpush1.bf16.msra.mxu0 %v1119
        %1495 = vmatprep.subr.bf16.mxu0 %v1124
        %1496 = vmatpush1.bf16.msra.mxu0 %v1123
        %1497 = vmatprep.subr.bf16.mxu0 %v1128
        %1498 = vmatpush1.bf16.msra.mxu0 %v1127
        %1499 = vmatprep.subr.bf16.mxu0 %v1132
        %1500 = vmatpush1.bf16.msra.mxu0 %v1131
        %1501 = vmatprep.subr.bf16.mxu0 %v1136
        %1502 = vmatpush1.bf16.msra.mxu0 %v1135
        %1503 = vmatprep.subr.bf16.mxu0 %v1140
        %1504 = vmatpush1.bf16.msra.mxu0 %v1139
        %1505 = vmatprep.subr.bf16.mxu0 %v1144
        %1506 = vmatpush1.bf16.msra.mxu0 %v1143
        %1507 = vmatprep.subr.bf16.mxu0 %v1148
        %1508 = vmatpush1.bf16.msra.mxu0 %v1147
        %1509 = vmatprep.subr.bf16.mxu0 %v1152
        %1510 = vmatpush1.bf16.msra.mxu0 %v1151
        %1511 = vmatprep.subr.bf16.mxu0 %v1156
        %1512 = vmatpush1.bf16.msra.mxu0 %v1155
        %1513 = vmatprep.subr.bf16.mxu0 %v1160
        %1514 = vmatpush1.bf16.msra.mxu0 %v1159
        %1515 = vmatprep.subr.bf16.mxu0 %v1164
        %1516 = vmatpush1.bf16.msra.mxu0 %v1163
        %1517 = vmatprep.subr.bf16.mxu0 %v1168
        %1518 = vmatpush1.bf16.msra.mxu0 %v1167
        %1519 = vmatprep.subr.bf16.mxu0 %v1172
        %1520 = vmatpush1.bf16.msra.mxu0 %v1171
        %1521 = vmatprep.subr.bf16.mxu0 %v1176
        %1522 = vmatpush1.bf16.msra.mxu0 %v1175
        %1523 = vmatprep.subr.bf16.mxu0 %v1180
        %1524 = vmatpush1.bf16.msra.mxu0 %v1179
        %1525 = vmatprep.mubr.bf16.mxu0 %v476
        %1526 = vmatmul.mubr.bf16.gmra.mrb[0].mxu0 %v475
        %v1527 = vpop.f32.mrb[0].mxu0
        %v1528 = vadd.f32 %v1487, %v1527
        %v1529 = vpop.f32.mrb[0].mxu0
        %v1530 = vadd.f32 %v1489, %v1529
        %v1531 = vpop.f32.mrb[0].mxu0
        %v1532 = vpop.f32.mrb[0].mxu0
        %1533 = vdwg.mxu0
        %1534 = vmatprep.subr.bf16.mxu0 %v1184
        %1535 = vmatpush1.bf16.msra.mxu0 %v1183
        %1536 = vmatprep.subr.bf16.mxu0 %v1188
        %1537 = vmatpush1.bf16.msra.mxu0 %v1187
        %1538 = vmatprep.subr.bf16.mxu0 %v1192
        %1539 = vmatpush1.bf16.msra.mxu0 %v1191
        %1540 = vmatprep.subr.bf16.mxu0 %v1196
        %1541 = vmatpush1.bf16.msra.mxu0 %v1195
        %1542 = vmatprep.subr.bf16.mxu0 %v1200
        %1543 = vmatpush1.bf16.msra.mxu0 %v1199
        %1544 = vmatprep.subr.bf16.mxu0 %v1204
        %1545 = vmatpush1.bf16.msra.mxu0 %v1203
        %1546 = vmatprep.subr.bf16.mxu0 %v1208
        %1547 = vmatpush1.bf16.msra.mxu0 %v1207
        %1548 = vmatprep.subr.bf16.mxu0 %v1212
        %1549 = vmatpush1.bf16.msra.mxu0 %v1211
        %1550 = vmatprep.subr.bf16.mxu0 %v1216
        %1551 = vmatpush1.bf16.msra.mxu0 %v1215
        %1552 = vmatprep.subr.bf16.mxu0 %v1220
        %1553 = vmatpush1.bf16.msra.mxu0 %v1219
        %1554 = vmatprep.subr.bf16.mxu0 %v1224
        %1555 = vmatpush1.bf16.msra.mxu0 %v1223
        %1556 = vmatprep.subr.bf16.mxu0 %v1228
        %1557 = vmatpush1.bf16.msra.mxu0 %v1227
        %1558 = vmatprep.subr.bf16.mxu0 %v1232
        %1559 = vmatpush1.bf16.msra.mxu0 %v1231
        %1560 = vmatprep.subr.bf16.mxu0 %v1236
        %1561 = vmatpush1.bf16.msra.mxu0 %v1235
        %1562 = vmatprep.subr.bf16.mxu0 %v1240
        %1563 = vmatpush1.bf16.msra.mxu0 %v1239
        %1564 = vmatprep.subr.bf16.mxu0 %v1244
        %1565 = vmatpush1.bf16.msra.mxu0 %v1243
        %1566 = vmatprep.mubr.bf16.mxu0 %v478
        %1567 = vmatmul.mubr.bf16.gmra.mrb[0].mxu0 %v477
        %v1568 = vpop.f32.mrb[0].mxu0
        %v1569 = vadd.f32 %v1528, %v1568
        %v1570 = vpop.f32.mrb[0].mxu0
        %v1571 = vadd.f32 %v1530, %v1570
        %v1572 = vpop.f32.mrb[0].mxu0
        %v1573 = vpop.f32.mrb[0].mxu0
        %1574 = vdwg.mxu0
        %1575 = vmatprep.subr.bf16.mxu0 %v738
        %1576 = vmatpush1.bf16.msra.mxu0 %v737
        %1577 = vmatprep.subr.bf16.mxu0 %v742
        %1578 = vmatpush1.bf16.msra.mxu0 %v741
        %1579 = vmatprep.subr.bf16.mxu0 %v746
        %1580 = vmatpush1.bf16.msra.mxu0 %v745
        %1581 = vmatprep.subr.bf16.mxu0 %v750
        %1582 = vmatpush1.bf16.msra.mxu0 %v749
        %1583 = vmatprep.subr.bf16.mxu0 %v754
        %1584 = vmatpush1.bf16.msra.mxu0 %v753
        %1585 = vmatprep.subr.bf16.mxu0 %v758
        %1586 = vmatpush1.bf16.msra.mxu0 %v757
        %1587 = vmatprep.subr.bf16.mxu0 %v762
        %1588 = vmatpush1.bf16.msra.mxu0 %v761
        %1589 = vmatprep.subr.bf16.mxu0 %v766
        %1590 = vmatpush1.bf16.msra.mxu0 %v765
        %1591 = vmatprep.subr.bf16.mxu0 %v770
        %1592 = vmatpush1.bf16.msra.mxu0 %v769
        %1593 = vmatprep.subr.bf16.mxu0 %v774
        %1594 = vmatpush1.bf16.msra.mxu0 %v773
        %1595 = vmatprep.subr.bf16.mxu0 %v778
        %1596 = vmatpush1.bf16.msra.mxu0 %v777
        %1597 = vmatprep.subr.bf16.mxu0 %v782
        %1598 = vmatpush1.bf16.msra.mxu0 %v781
        %1599 = vmatprep.subr.bf16.mxu0 %v786
        %1600 = vmatpush1.bf16.msra.mxu0 %v785
        %1601 = vmatprep.subr.bf16.mxu0 %v790
        %1602 = vmatpush1.bf16.msra.mxu0 %v789
        %1603 = vmatprep.subr.bf16.mxu0 %v794
        %1604 = vmatpush1.bf16.msra.mxu0 %v793
        %1605 = vmatprep.subr.bf16.mxu0 %v798
        %1606 = vmatpush1.bf16.msra.mxu0 %v797
        %1607 = vmatprep.mubr.bf16.mxu0 %v464
        %1608 = vmatmul.mubr.bf16.gmra.mrb[0].mxu0 %v463
        %v1609 = vpop.f32.mrb[0].mxu0
        %v1610 = vadd.f32 0.0, %v1609
        %v1611 = vpop.f32.mrb[0].mxu0
        %v1612 = vadd.f32 0.0, %v1611
        %v1613 = vpop.f32.mrb[0].mxu0
        %v1614 = vpop.f32.mrb[0].mxu0
        %1615 = vdwg.mxu0
        %1616 = vmatprep.subr.bf16.mxu0 %v802
        %1617 = vmatpush1.bf16.msra.mxu0 %v801
        %1618 = vmatprep.subr.bf16.mxu0 %v806
        %1619 = vmatpush1.bf16.msra.mxu0 %v805
        %1620 = vmatprep.subr.bf16.mxu0 %v810
        %1621 = vmatpush1.bf16.msra.mxu0 %v809
        %1622 = vmatprep.subr.bf16.mxu0 %v814
        %1623 = vmatpush1.bf16.msra.mxu0 %v813
        %1624 = vmatprep.subr.bf16.mxu0 %v818
        %1625 = vmatpush1.bf16.msra.mxu0 %v817
        %1626 = vmatprep.subr.bf16.mxu0 %v822
        %1627 = vmatpush1.bf16.msra.mxu0 %v821
        %1628 = vmatprep.subr.bf16.mxu0 %v826
        %1629 = vmatpush1.bf16.msra.mxu0 %v825
        %1630 = vmatprep.subr.bf16.mxu0 %v830
        %1631 = vmatpush1.bf16.msra.mxu0 %v829
        %1632 = vmatprep.subr.bf16.mxu0 %v834
        %1633 = vmatpush1.bf16.msra.mxu0 %v833
        %1634 = vmatprep.subr.bf16.mxu0 %v838
        %1635 = vmatpush1.bf16.msra.mxu0 %v837
        %1636 = vmatprep.subr.bf16.mxu0 %v842
        %1637 = vmatpush1.bf16.msra.mxu0 %v841
        %1638 = vmatprep.subr.bf16.mxu0 %v846
        %1639 = vmatpush1.bf16.msra.mxu0 %v845
        %1640 = vmatprep.subr.bf16.mxu0 %v850
        %1641 = vmatpush1.bf16.msra.mxu0 %v849
        %1642 = vmatprep.subr.bf16.mxu0 %v854
        %1643 = vmatpush1.bf16.msra.mxu0 %v853
        %1644 = vmatprep.subr.bf16.mxu0 %v858
        %1645 = vmatpush1.bf16.msra.mxu0 %v857
        %1646 = vmatprep.subr.bf16.mxu0 %v862
        %1647 = vmatpush1.bf16.msra.mxu0 %v861
        %1648 = vmatprep.mubr.bf16.mxu0 %v466
        %1649 = vmatmul.mubr.bf16.gmra.mrb[0].mxu0 %v465
        %v1650 = vpop.f32.mrb[0].mxu0
        %v1651 = vadd.f32 %v1610, %v1650
        %v1652 = vpop.f32.mrb[0].mxu0
        %v1653 = vadd.f32 %v1612, %v1652
        %v1654 = vpop.f32.mrb[0].mxu0
        %v1655 = vpop.f32.mrb[0].mxu0
        %1656 = vdwg.mxu0
        %1657 = vmatprep.subr.bf16.mxu0 %v866
        %1658 = vmatpush1.bf16.msra.mxu0 %v865
        %1659 = vmatprep.subr.bf16.mxu0 %v870
        %1660 = vmatpush1.bf16.msra.mxu0 %v869
        %1661 = vmatprep.subr.bf16.mxu0 %v874
        %1662 = vmatpush1.bf16.msra.mxu0 %v873
        %1663 = vmatprep.subr.bf16.mxu0 %v878
        %1664 = vmatpush1.bf16.msra.mxu0 %v877
        %1665 = vmatprep.subr.bf16.mxu0 %v882
        %1666 = vmatpush1.bf16.msra.mxu0 %v881
        %1667 = vmatprep.subr.bf16.mxu0 %v886
        %1668 = vmatpush1.bf16.msra.mxu0 %v885
        %1669 = vmatprep.subr.bf16.mxu0 %v890
        %1670 = vmatpush1.bf16.msra.mxu0 %v889
        %1671 = vmatprep.subr.bf16.mxu0 %v894
        %1672 = vmatpush1.bf16.msra.mxu0 %v893
        %1673 = vmatprep.subr.bf16.mxu0 %v898
        %1674 = vmatpush1.bf16.msra.mxu0 %v897
        %1675 = vmatprep.subr.bf16.mxu0 %v902
        %1676 = vmatpush1.bf16.msra.mxu0 %v901
        %1677 = vmatprep.subr.bf16.mxu0 %v906
        %1678 = vmatpush1.bf16.msra.mxu0 %v905
        %1679 = vmatprep.subr.bf16.mxu0 %v910
        %1680 = vmatpush1.bf16.msra.mxu0 %v909
        %1681 = vmatprep.subr.bf16.mxu0 %v914
        %1682 = vmatpush1.bf16.msra.mxu0 %v913
        %1683 = vmatprep.subr.bf16.mxu0 %v918
        %1684 = vmatpush1.bf16.msra.mxu0 %v917
        %1685 = vmatprep.subr.bf16.mxu0 %v922
        %1686 = vmatpush1.bf16.msra.mxu0 %v921
        %1687 = vmatprep.subr.bf16.mxu0 %v926
        %1688 = vmatpush1.bf16.msra.mxu0 %v925
        %1689 = vmatprep.mubr.bf16.mxu0 %v468
        %1690 = vmatmul.mubr.bf16.gmra.mrb[0].mxu0 %v467
        %v1691 = vpop.f32.mrb[0].mxu0
        %v1692 = vadd.f32 %v1651, %v1691
        %v1693 = vpop.f32.mrb[0].mxu0
        %v1694 = vadd.f32 %v1653, %v1693
        %v1695 = vpop.f32.mrb[0].mxu0
        %v1696 = vpop.f32.mrb[0].mxu0
        %1697 = vdwg.mxu0
        %1698 = vmatprep.subr.bf16.mxu0 %v930
        %1699 = vmatpush1.bf16.msra.mxu0 %v929
        %1700 = vmatprep.subr.bf16.mxu0 %v934
        %1701 = vmatpush1.bf16.msra.mxu0 %v933
        %1702 = vmatprep.subr.bf16.mxu0 %v938
        %1703 = vmatpush1.bf16.msra.mxu0 %v937
        %1704 = vmatprep.subr.bf16.mxu0 %v942
        %1705 = vmatpush1.bf16.msra.mxu0 %v941
        %1706 = vmatprep.subr.bf16.mxu0 %v946
        %1707 = vmatpush1.bf16.msra.mxu0 %v945
        %1708 = vmatprep.subr.bf16.mxu0 %v950
        %1709 = vmatpush1.bf16.msra.mxu0 %v949
        %1710 = vmatprep.subr.bf16.mxu0 %v954
        %1711 = vmatpush1.bf16.msra.mxu0 %v953
        %1712 = vmatprep.subr.bf16.mxu0 %v958
        %1713 = vmatpush1.bf16.msra.mxu0 %v957
        %1714 = vmatprep.subr.bf16.mxu0 %v962
        %1715 = vmatpush1.bf16.msra.mxu0 %v961
        %1716 = vmatprep.subr.bf16.mxu0 %v966
        %1717 = vmatpush1.bf16.msra.mxu0 %v965
        %1718 = vmatprep.subr.bf16.mxu0 %v970
        %1719 = vmatpush1.bf16.msra.mxu0 %v969
        %1720 = vmatprep.subr.bf16.mxu0 %v974
        %1721 = vmatpush1.bf16.msra.mxu0 %v973
        %1722 = vmatprep.subr.bf16.mxu0 %v978
        %1723 = vmatpush1.bf16.msra.mxu0 %v977
        %1724 = vmatprep.subr.bf16.mxu0 %v982
        %1725 = vmatpush1.bf16.msra.mxu0 %v981
        %1726 = vmatprep.subr.bf16.mxu0 %v986
        %1727 = vmatpush1.bf16.msra.mxu0 %v985
        %1728 = vmatprep.subr.bf16.mxu0 %v990
        %1729 = vmatpush1.bf16.msra.mxu0 %v989
        %1730 = vmatprep.mubr.bf16.mxu0 %v470
        %1731 = vmatmul.mubr.bf16.gmra.mrb[0].mxu0 %v469
        %v1732 = vpop.f32.mrb[0].mxu0
        %v1733 = vadd.f32 %v1692, %v1732
        %v1734 = vpop.f32.mrb[0].mxu0
        %v1735 = vadd.f32 %v1694, %v1734
        %v1736 = vpop.f32.mrb[0].mxu0
        %v1737 = vpop.f32.mrb[0].mxu0
        %1738 = vdwg.mxu0
        %1739 = vmatprep.subr.bf16.mxu0 %v994
        %1740 = vmatpush1.bf16.msra.mxu0 %v993
        %1741 = vmatprep.subr.bf16.mxu0 %v998
        %1742 = vmatpush1.bf16.msra.mxu0 %v997
        %1743 = vmatprep.subr.bf16.mxu0 %v1002
        %1744 = vmatpush1.bf16.msra.mxu0 %v1001
        %1745 = vmatprep.subr.bf16.mxu0 %v1006
        %1746 = vmatpush1.bf16.msra.mxu0 %v1005
        %1747 = vmatprep.subr.bf16.mxu0 %v1010
        %1748 = vmatpush1.bf16.msra.mxu0 %v1009
        %1749 = vmatprep.subr.bf16.mxu0 %v1014
        %1750 = vmatpush1.bf16.msra.mxu0 %v1013
        %1751 = vmatprep.subr.bf16.mxu0 %v1018
        %1752 = vmatpush1.bf16.msra.mxu0 %v1017
        %1753 = vmatprep.subr.bf16.mxu0 %v1022
        %1754 = vmatpush1.bf16.msra.mxu0 %v1021
        %1755 = vmatprep.subr.bf16.mxu0 %v1026
        %1756 = vmatpush1.bf16.msra.mxu0 %v1025
        %1757 = vmatprep.subr.bf16.mxu0 %v1030
        %1758 = vmatpush1.bf16.msra.mxu0 %v1029
        %1759 = vmatprep.subr.bf16.mxu0 %v1034
        %1760 = vmatpush1.bf16.msra.mxu0 %v1033
        %1761 = vmatprep.subr.bf16.mxu0 %v1038
        %1762 = vmatpush1.bf16.msra.mxu0 %v1037
        %1763 = vmatprep.subr.bf16.mxu0 %v1042
        %1764 = vmatpush1.bf16.msra.mxu0 %v1041
        %1765 = vmatprep.subr.bf16.mxu0 %v1046
        %1766 = vmatpush1.bf16.msra.mxu0 %v1045
        %1767 = vmatprep.subr.bf16.mxu0 %v1050
        %1768 = vmatpush1.bf16.msra.mxu0 %v1049
        %1769 = vmatprep.subr.bf16.mxu0 %v1054
        %1770 = vmatpush1.bf16.msra.mxu0 %v1053
        %1771 = vmatprep.mubr.bf16.mxu0 %v472
        %1772 = vmatmul.mubr.bf16.gmra.mrb[0].mxu0 %v471
        %v1773 = vpop.f32.mrb[0].mxu0
        %v1774 = vadd.f32 %v1733, %v1773
        %v1775 = vpop.f32.mrb[0].mxu0
        %v1776 = vadd.f32 %v1735, %v1775
        %v1777 = vpop.f32.mrb[0].mxu0
        %v1778 = vpop.f32.mrb[0].mxu0
        %1779 = vdwg.mxu0
        %1780 = vmatprep.subr.bf16.mxu0 %v1058
        %1781 = vmatpush1.bf16.msra.mxu0 %v1057
        %1782 = vmatprep.subr.bf16.mxu0 %v1062
        %1783 = vmatpush1.bf16.msra.mxu0 %v1061
        %1784 = vmatprep.subr.bf16.mxu0 %v1066
        %1785 = vmatpush1.bf16.msra.mxu0 %v1065
        %1786 = vmatprep.subr.bf16.mxu0 %v1070
        %1787 = vmatpush1.bf16.msra.mxu0 %v1069
        %1788 = vmatprep.subr.bf16.mxu0 %v1074
        %1789 = vmatpush1.bf16.msra.mxu0 %v1073
        %1790 = vmatprep.subr.bf16.mxu0 %v1078
        %1791 = vmatpush1.bf16.msra.mxu0 %v1077
        %1792 = vmatprep.subr.bf16.mxu0 %v1082
        %1793 = vmatpush1.bf16.msra.mxu0 %v1081
        %1794 = vmatprep.subr.bf16.mxu0 %v1086
        %1795 = vmatpush1.bf16.msra.mxu0 %v1085
        %1796 = vmatprep.subr.bf16.mxu0 %v1090
        %1797 = vmatpush1.bf16.msra.mxu0 %v1089
        %1798 = vmatprep.subr.bf16.mxu0 %v1094
        %1799 = vmatpush1.bf16.msra.mxu0 %v1093
        %1800 = vmatprep.subr.bf16.mxu0 %v1098
        %1801 = vmatpush1.bf16.msra.mxu0 %v1097
        %1802 = vmatprep.subr.bf16.mxu0 %v1102
        %1803 = vmatpush1.bf16.msra.mxu0 %v1101
        %1804 = vmatprep.subr.bf16.mxu0 %v1106
        %1805 = vmatpush1.bf16.msra.mxu0 %v1105
        %1806 = vmatprep.subr.bf16.mxu0 %v1110
        %1807 = vmatpush1.bf16.msra.mxu0 %v1109
        %1808 = vmatprep.subr.bf16.mxu0 %v1114
        %1809 = vmatpush1.bf16.msra.mxu0 %v1113
        %1810 = vmatprep.subr.bf16.mxu0 %v1118
        %1811 = vmatpush1.bf16.msra.mxu0 %v1117
        %1812 = vmatprep.mubr.bf16.mxu0 %v474
        %1813 = vmatmul.mubr.bf16.gmra.mrb[0].mxu0 %v473
        %v1814 = vpop.f32.mrb[0].mxu0
        %v1815 = vadd.f32 %v1774, %v1814
        %v1816 = vpop.f32.mrb[0].mxu0
        %v1817 = vadd.f32 %v1776, %v1816
        %v1818 = vpop.f32.mrb[0].mxu0
        %v1819 = vpop.f32.mrb[0].mxu0
        %1820 = vdwg.mxu0
        %1821 = vmatprep.subr.bf16.mxu0 %v1122
        %1822 = vmatpush1.bf16.msra.mxu0 %v1121
        %1823 = vmatprep.subr.bf16.mxu0 %v1126
        %1824 = vmatpush1.bf16.msra.mxu0 %v1125
        %1825 = vmatprep.subr.bf16.mxu0 %v1130
        %1826 = vmatpush1.bf16.msra.mxu0 %v1129
        %1827 = vmatprep.subr.bf16.mxu0 %v1134
        %1828 = vmatpush1.bf16.msra.mxu0 %v1133
        %1829 = vmatprep.subr.bf16.mxu0 %v1138
        %1830 = vmatpush1.bf16.msra.mxu0 %v1137
        %1831 = vmatprep.subr.bf16.mxu0 %v1142
        %1832 = vmatpush1.bf16.msra.mxu0 %v1141
        %1833 = vmatprep.subr.bf16.mxu0 %v1146
        %1834 = vmatpush1.bf16.msra.mxu0 %v1145
        %1835 = vmatprep.subr.bf16.mxu0 %v1150
        %1836 = vmatpush1.bf16.msra.mxu0 %v1149
        %1837 = vmatprep.subr.bf16.mxu0 %v1154
        %1838 = vmatpush1.bf16.msra.mxu0 %v1153
        %1839 = vmatprep.subr.bf16.mxu0 %v1158
        %1840 = vmatpush1.bf16.msra.mxu0 %v1157
        %1841 = vmatprep.subr.bf16.mxu0 %v1162
        %1842 = vmatpush1.bf16.msra.mxu0 %v1161
        %1843 = vmatprep.subr.bf16.mxu0 %v1166
        %1844 = vmatpush1.bf16.msra.mxu0 %v1165
        %1845 = vmatprep.subr.bf16.mxu0 %v1170
        %1846 = vmatpush1.bf16.msra.mxu0 %v1169
        %1847 = vmatprep.subr.bf16.mxu0 %v1174
        %1848 = vmatpush1.bf16.msra.mxu0 %v1173
        %1849 = vmatprep.subr.bf16.mxu0 %v1178
        %1850 = vmatpush1.bf16.msra.mxu0 %v1177
        %1851 = vmatprep.subr.bf16.mxu0 %v1182
        %1852 = vmatpush1.bf16.msra.mxu0 %v1181
        %1853 = vmatprep.mubr.bf16.mxu0 %v476
        %1854 = vmatmul.mubr.bf16.gmra.mrb[0].mxu0 %v475
        %v1855 = vpop.f32.mrb[0].mxu0
        %v1856 = vadd.f32 %v1815, %v1855
        %v1857 = vpop.f32.mrb[0].mxu0
        %v1858 = vadd.f32 %v1817, %v1857
        %v1859 = vpop.f32.mrb[0].mxu0
        %v1860 = vpop.f32.mrb[0].mxu0
        %1861 = vdwg.mxu0
        %1862 = vmatprep.subr.bf16.mxu0 %v1186
        %1863 = vmatpush1.bf16.msra.mxu0 %v1185
        %1864 = vmatprep.subr.bf16.mxu0 %v1190
        %1865 = vmatpush1.bf16.msra.mxu0 %v1189
        %1866 = vmatprep.subr.bf16.mxu0 %v1194
        %1867 = vmatpush1.bf16.msra.mxu0 %v1193
        %1868 = vmatprep.subr.bf16.mxu0 %v1198
        %1869 = vmatpush1.bf16.msra.mxu0 %v1197
        %1870 = vmatprep.subr.bf16.mxu0 %v1202
        %1871 = vmatpush1.bf16.msra.mxu0 %v1201
        %1872 = vmatprep.subr.bf16.mxu0 %v1206
        %1873 = vmatpush1.bf16.msra.mxu0 %v1205
        %1874 = vmatprep.subr.bf16.mxu0 %v1210
        %1875 = vmatpush1.bf16.msra.mxu0 %v1209
        %1876 = vmatprep.subr.bf16.mxu0 %v1214
        %1877 = vmatpush1.bf16.msra.mxu0 %v1213
        %1878 = vmatprep.subr.bf16.mxu0 %v1218
        %1879 = vmatpush1.bf16.msra.mxu0 %v1217
        %1880 = vmatprep.subr.bf16.mxu0 %v1222
        %1881 = vmatpush1.bf16.msra.mxu0 %v1221
        %1882 = vmatprep.subr.bf16.mxu0 %v1226
        %1883 = vmatpush1.bf16.msra.mxu0 %v1225
        %1884 = vmatprep.subr.bf16.mxu0 %v1230
        %1885 = vmatpush1.bf16.msra.mxu0 %v1229
        %1886 = vmatprep.subr.bf16.mxu0 %v1234
        %1887 = vmatpush1.bf16.msra.mxu0 %v1233
        %1888 = vmatprep.subr.bf16.mxu0 %v1238
        %1889 = vmatpush1.bf16.msra.mxu0 %v1237
        %1890 = vmatprep.subr.bf16.mxu0 %v1242
        %1891 = vmatpush1.bf16.msra.mxu0 %v1241
        %1892 = vmatprep.subr.bf16.mxu0 %v1246
        %1893 = vmatpush1.bf16.msra.mxu0 %v1245
        %1894 = vmatprep.mubr.bf16.mxu0 %v478
        %1895 = vmatmul.mubr.bf16.gmra.mrb[0].mxu0 %v477
        %v1896 = vpop.f32.mrb[0].mxu0
        %v1897 = vadd.f32 %v1856, %v1896
        %v1898 = vpop.f32.mrb[0].mxu0
        %v1899 = vadd.f32 %v1858, %v1898
        %v1900 = vpop.f32.mrb[0].mxu0
        %v1901 = vpop.f32.mrb[0].mxu0
        %1902 = vdwg.mxu0
        %v1903 = vrot.slane %v1569, 4
        %v1904 = vadd.f32 %v1569, %v1903
        %v1905 = vrot.slane %v1904, 2
        %v1906 = vadd.f32 %v1904, %v1905
        %v1907 = vrot.slane %v1906, 1
        %v1908 = vadd.f32 %v1906, %v1907
        %v1909 = vrot.slane %v1571, 4
        %v1910 = vadd.f32 %v1571, %v1909
        %v1911 = vrot.slane %v1910, 2
        %v1912 = vadd.f32 %v1910, %v1911
        %v1913 = vrot.slane %v1912, 1
        %v1914 = vadd.f32 %v1912, %v1913
        %v1915 = vrot.slane %v1897, 4
        %v1916 = vadd.f32 %v1897, %v1915
        %v1917 = vrot.slane %v1916, 2
        %v1918 = vadd.f32 %v1916, %v1917
        %v1919 = vrot.slane %v1918, 1
        %v1920 = vadd.f32 %v1918, %v1919
        %v1921 = vrot.slane %v1899, 4
        %v1922 = vadd.f32 %v1899, %v1921
        %v1923 = vrot.slane %v1922, 2
        %v1924 = vadd.f32 %v1922, %v1923
        %v1925 = vrot.slane %v1924, 1
        %v1926 = vadd.f32 %v1924, %v1925
        %v1927 = vrcp.pop 8.0
        %v1928 = vmul.f32 %v1908, %v1927
        %v1929 = vmul.f32 %v1914, %v1927
        %v1930 = vmul.f32 %v1920, %v1927
        %v1931 = vmul.f32 %v1926, %v1927
        %v1932 = vsub.f32 %v1569, %v1928
        %v1933 = vsub.f32 %v1571, %v1929
        %v1934 = vsub.f32 %v1897, %v1930
        %v1935 = vsub.f32 %v1899, %v1931
        %v1936 = vmul.f32 %v1932, %v1932
        %v1937 = vmul.f32 %v1933, %v1933
        %v1938 = vmul.f32 %v1934, %v1934
        %v1939 = vmul.f32 %v1935, %v1935
        %v1940 = vrot.slane %v1936, 4
        %v1941 = vadd.f32 %v1936, %v1940
        %v1942 = vrot.slane %v1941, 2
        %v1943 = vadd.f32 %v1941, %v1942
        %v1944 = vrot.slane %v1943, 1
        %v1945 = vadd.f32 %v1943, %v1944
        %v1946 = vrot.slane %v1937, 4
        %v1947 = vadd.f32 %v1937, %v1946
        %v1948 = vrot.slane %v1947, 2
        %v1949 = vadd.f32 %v1947, %v1948
        %v1950 = vrot.slane %v1949, 1
        %v1951 = vadd.f32 %v1949, %v1950
        %v1952 = vrot.slane %v1938, 4
        %v1953 = vadd.f32 %v1938, %v1952
        %v1954 = vrot.slane %v1953, 2
        %v1955 = vadd.f32 %v1953, %v1954
        %v1956 = vrot.slane %v1955, 1
        %v1957 = vadd.f32 %v1955, %v1956
        %v1958 = vrot.slane %v1939, 4
        %v1959 = vadd.f32 %v1939, %v1958
        %v1960 = vrot.slane %v1959, 2
        %v1961 = vadd.f32 %v1959, %v1960
        %v1962 = vrot.slane %v1961, 1
        %v1963 = vadd.f32 %v1961, %v1962
        %v1964 = vmul.f32 %v1945, %v1927
        %v1965 = vmul.f32 %v1951, %v1927
        %v1966 = vmul.f32 %v1957, %v1927
        %v1967 = vmul.f32 %v1963, %v1927
        %v1968 = vld [vmem:[%s365] sm:$0xf]
        %v1969 = vadd.f32 %v1964, 1e-05
        %v1970 = vadd.f32 %v1965, 1e-05
        %v1971 = vadd.f32 %v1966, 1e-05
        %v1972 = vadd.f32 %v1967, 1e-05
        %v1973 = vrsqrt.pop %v1969
        %v1974 = vrsqrt.pop %v1970
        %v1975 = vrsqrt.pop %v1971
        %v1976 = vrsqrt.pop %v1972
        %v1981 = vcombine.low %v1973, %v1974
        %v1982 = vcombine.low %v1975, %v1976
        %v1984 = vunpack.c.l.s4 1966171168
        %v1985 = vunpack.c.0.s8 %v1984
        %v1986 = vlaneseq
        %v1987 = vshrl.u32 %v1986, 7
        %v1988 = vsub.s32 %v1985, %v1987
        %v1989 = vrot.slane %v1981, %v1988
        %v1991 = vunpack.c.l.s4 1966171168
        %v1992 = vunpack.c.0.s8 %v1991
        %v1993 = vlaneseq
        %v1994 = vshrl.u32 %v1993, 7
        %v1995 = vsub.s32 %v1992, %v1994
        %v1996 = vrot.slane %v1982, %v1995
        %v1997 = vcombine.low %v1989, %v1996
        %v1999 = vunpack.c.l.s4 1966171168
        %v2000 = vunpack.c.0.s8 %v1999
        %v2001 = vlaneseq
        %v2002 = vshrl.u32 %v2001, 7
        %v2003 = vsub.s32 %v2000, %v2002
        %v2004 = vrot.slane %v1997, %v2003
        %v2006 = vmul.f32 %v1968, %v2004
        %v2008 = vlaneseq
        %v2009 = vshrl.u32 %v2008, 7
        %v2010 = vsub.s32 0, %v2009
        %v2011 = vrot.slane %v2006, %v2010
        %v2012 = vlaneseq
        %v2013 = vshrl.u32 %v2012, 7
        %v2014 = vsub.s32 1, %v2013
        %v2015 = vrot.slane %v2006, %v2014
        %v2016 = vlaneseq
        %v2017 = vshrl.u32 %v2016, 7
        %v2018 = vsub.s32 2, %v2017
        %v2019 = vrot.slane %v2006, %v2018
        %v2020 = vlaneseq
        %v2021 = vshrl.u32 %v2020, 7
        %v2022 = vsub.s32 3, %v2021
        %v2023 = vrot.slane %v2006, %v2022
        %v2028 = vmul.f32 %v1932, %v2011
        %v2029 = vmul.f32 %v1933, %v2015
        %v2030 = vmul.f32 %v1934, %v2019
        %v2031 = vmul.f32 %v1935, %v2023
        %v2032 = vld [vmem:[%s374] sm:$0xf]
        %v2034 = vlaneseq
        %v2035 = vshrl.u32 %v2034, 7
        %v2036 = vsub.s32 0, %v2035
        %v2037 = vrot.slane %v2032, %v2036
        %v2038 = vlaneseq
        %v2039 = vshrl.u32 %v2038, 7
        %v2040 = vsub.s32 1, %v2039
        %v2041 = vrot.slane %v2032, %v2040
        %v2042 = vlaneseq
        %v2043 = vshrl.u32 %v2042, 7
        %v2044 = vsub.s32 2, %v2043
        %v2045 = vrot.slane %v2032, %v2044
        %v2046 = vlaneseq
        %v2047 = vshrl.u32 %v2046, 7
        %v2048 = vsub.s32 3, %v2047
        %v2049 = vrot.slane %v2032, %v2048
        %v2054 = vadd.f32 %v2028, %v2037
        %v2055 = vadd.f32 %v2029, %v2041
        %v2056 = vadd.f32 %v2030, %v2045
        %v2057 = vadd.f32 %v2031, %v2049
        %v2058 = vmax.f32 %v2054, 0.0
        %v2059 = vmax.f32 %v2055, 0.0
        %v2060 = vmax.f32 %v2056, 0.0
        %v2061 = vmax.f32 %v2057, 0.0
        %v2062 = vld [vmem:[%s383] sm:$0xff]
        %v2063 = vld [vmem:[%s383 + $0x8] sm:$0xff]
        %v2064 = vld [vmem:[%s383 + $0x10] sm:$0xff]
        %v2065 = vld [vmem:[%s383 + $0x18] sm:$0xff]
        %v2066 = vld [vmem:[%s383 + $0x20] sm:$0xff]
        %v2067 = vld [vmem:[%s383 + $0x28] sm:$0xff]
        %v2068 = vld [vmem:[%s383 + $0x30] sm:$0xff]
        %v2069 = vld [vmem:[%s383 + $0x38] sm:$0xff]
        %v2070 = vld [vmem:[%s383 + $0x40] sm:$0xff]
        %v2071 = vld [vmem:[%s383 + $0x48] sm:$0xff]
        %v2072 = vld [vmem:[%s383 + $0x50] sm:$0xff]
        %v2073 = vld [vmem:[%s383 + $0x58] sm:$0xff]
        %v2074 = vld [vmem:[%s383 + $0x60] sm:$0xff]
        %v2075 = vld [vmem:[%s383 + $0x68] sm:$0xff]
        %v2076 = vld [vmem:[%s383 + $0x70] sm:$0xff]
        %v2077 = vld [vmem:[%s383 + $0x78] sm:$0xff]
        %v2078 = vld [vmem:[%s383 + $0x80] sm:$0xff]
        %v2079 = vld [vmem:[%s383 + $0x88] sm:$0xff]
        %v2080 = vld [vmem:[%s383 + $0x90] sm:$0xff]
        %v2081 = vld [vmem:[%s383 + $0x98] sm:$0xff]
        %v2082 = vld [vmem:[%s383 + $0xa0] sm:$0xff]
        %v2083 = vld [vmem:[%s383 + $0xa8] sm:$0xff]
        %v2084 = vld [vmem:[%s383 + $0xb0] sm:$0xff]
        %v2085 = vld [vmem:[%s383 + $0xb8] sm:$0xff]
        %v2086 = vld [vmem:[%s383 + $0xc0] sm:$0xff]
        %v2087 = vld [vmem:[%s383 + $0xc8] sm:$0xff]
        %v2088 = vld [vmem:[%s383 + $0xd0] sm:$0xff]
        %v2089 = vld [vmem:[%s383 + $0xd8] sm:$0xff]
        %v2090 = vld [vmem:[%s383 + $0xe0] sm:$0xff]
        %v2091 = vld [vmem:[%s383 + $0xe8] sm:$0xff]
        %v2092 = vld [vmem:[%s383 + $0xf0] sm:$0xff]
        %v2093 = vld [vmem:[%s383 + $0xf8] sm:$0xff]
        %v2094 = vld [vmem:[%s383 + $0x100] sm:$0xff]
        %v2095 = vld [vmem:[%s383 + $0x108] sm:$0xff]
        %v2096 = vld [vmem:[%s383 + $0x110] sm:$0xff]
        %v2097 = vld [vmem:[%s383 + $0x118] sm:$0xff]
        %v2098 = vld [vmem:[%s383 + $0x120] sm:$0xff]
        %v2099 = vld [vmem:[%s383 + $0x128] sm:$0xff]
        %v2100 = vld [vmem:[%s383 + $0x130] sm:$0xff]
        %v2101 = vld [vmem:[%s383 + $0x138] sm:$0xff]
        %v2102 = vld [vmem:[%s383 + $0x140] sm:$0xff]
        %v2103 = vld [vmem:[%s383 + $0x148] sm:$0xff]
        %v2104 = vld [vmem:[%s383 + $0x150] sm:$0xff]
        %v2105 = vld [vmem:[%s383 + $0x158] sm:$0xff]
        %v2106 = vld [vmem:[%s383 + $0x160] sm:$0xff]
        %v2107 = vld [vmem:[%s383 + $0x168] sm:$0xff]
        %v2108 = vld [vmem:[%s383 + $0x170] sm:$0xff]
        %v2109 = vld [vmem:[%s383 + $0x178] sm:$0xff]
        %v2110 = vld [vmem:[%s383 + $0x180] sm:$0xff]
        %v2111 = vld [vmem:[%s383 + $0x188] sm:$0xff]
        %v2112 = vld [vmem:[%s383 + $0x190] sm:$0xff]
        %v2113 = vld [vmem:[%s383 + $0x198] sm:$0xff]
        %v2114 = vld [vmem:[%s383 + $0x1a0] sm:$0xff]
        %v2115 = vld [vmem:[%s383 + $0x1a8] sm:$0xff]
        %v2116 = vld [vmem:[%s383 + $0x1b0] sm:$0xff]
        %v2117 = vld [vmem:[%s383 + $0x1b8] sm:$0xff]
        %v2118 = vld [vmem:[%s383 + $0x1c0] sm:$0xff]
        %v2119 = vld [vmem:[%s383 + $0x1c8] sm:$0xff]
        %v2120 = vld [vmem:[%s383 + $0x1d0] sm:$0xff]
        %v2121 = vld [vmem:[%s383 + $0x1d8] sm:$0xff]
        %v2122 = vld [vmem:[%s383 + $0x1e0] sm:$0xff]
        %v2123 = vld [vmem:[%s383 + $0x1e8] sm:$0xff]
        %v2124 = vld [vmem:[%s383 + $0x1f0] sm:$0xff]
        %v2125 = vld [vmem:[%s383 + $0x1f8] sm:$0xff]
        %v2126 = vunpack.c.l.s8.bf16 %v2062
        %v2127 = vunpack.c.l.s8.bf16 %v2063
        %v2128 = vunpack.c.l.s8.bf16 %v2064
        %v2129 = vunpack.c.l.s8.bf16 %v2065
        %v2130 = vunpack.c.h.s8.bf16 %v2062
        %v2131 = vunpack.c.h.s8.bf16 %v2063
        %v2132 = vunpack.c.h.s8.bf16 %v2064
        %v2133 = vunpack.c.h.s8.bf16 %v2065
        %v2134 = vunpack.c.l.s8.bf16 %v2066
        %v2135 = vunpack.c.l.s8.bf16 %v2067
        %v2136 = vunpack.c.l.s8.bf16 %v2068
        %v2137 = vunpack.c.l.s8.bf16 %v2069
        %v2138 = vunpack.c.h.s8.bf16 %v2066
        %v2139 = vunpack.c.h.s8.bf16 %v2067
        %v2140 = vunpack.c.h.s8.bf16 %v2068
        %v2141 = vunpack.c.h.s8.bf16 %v2069
        %v2142 = vunpack.c.l.s8.bf16 %v2070
        %v2143 = vunpack.c.l.s8.bf16 %v2071
        %v2144 = vunpack.c.l.s8.bf16 %v2072
        %v2145 = vunpack.c.l.s8.bf16 %v2073
        %v2146 = vunpack.c.h.s8.bf16 %v2070
        %v2147 = vunpack.c.h.s8.bf16 %v2071
        %v2148 = vunpack.c.h.s8.bf16 %v2072
        %v2149 = vunpack.c.h.s8.bf16 %v2073
        %v2150 = vunpack.c.l.s8.bf16 %v2074
        %v2151 = vunpack.c.l.s8.bf16 %v2075
        %v2152 = vunpack.c.l.s8.bf16 %v2076
        %v2153 = vunpack.c.l.s8.bf16 %v2077
        %v2154 = vunpack.c.h.s8.bf16 %v2074
        %v2155 = vunpack.c.h.s8.bf16 %v2075
        %v2156 = vunpack.c.h.s8.bf16 %v2076
        %v2157 = vunpack.c.h.s8.bf16 %v2077
        %v2158 = vunpack.c.l.s8.bf16 %v2078
        %v2159 = vunpack.c.l.s8.bf16 %v2079
        %v2160 = vunpack.c.l.s8.bf16 %v2080
        %v2161 = vunpack.c.l.s8.bf16 %v2081
        %v2162 = vunpack.c.h.s8.bf16 %v2078
        %v2163 = vunpack.c.h.s8.bf16 %v2079
        %v2164 = vunpack.c.h.s8.bf16 %v2080
        %v2165 = vunpack.c.h.s8.bf16 %v2081
        %v2166 = vunpack.c.l.s8.bf16 %v2082
        %v2167 = vunpack.c.l.s8.bf16 %v2083
        %v2168 = vunpack.c.l.s8.bf16 %v2084
        %v2169 = vunpack.c.l.s8.bf16 %v2085
        %v2170 = vunpack.c.h.s8.bf16 %v2082
        %v2171 = vunpack.c.h.s8.bf16 %v2083
        %v2172 = vunpack.c.h.s8.bf16 %v2084
        %v2173 = vunpack.c.h.s8.bf16 %v2085
        %v2174 = vunpack.c.l.s8.bf16 %v2086
        %v2175 = vunpack.c.l.s8.bf16 %v2087
        %v2176 = vunpack.c.l.s8.bf16 %v2088
        %v2177 = vunpack.c.l.s8.bf16 %v2089
        %v2178 = vunpack.c.h.s8.bf16 %v2086
        %v2179 = vunpack.c.h.s8.bf16 %v2087
        %v2180 = vunpack.c.h.s8.bf16 %v2088
        %v2181 = vunpack.c.h.s8.bf16 %v2089
        %v2182 = vunpack.c.l.s8.bf16 %v2090
        %v2183 = vunpack.c.l.s8.bf16 %v2091
        %v2184 = vunpack.c.l.s8.bf16 %v2092
        %v2185 = vunpack.c.l.s8.bf16 %v2093
        %v2186 = vunpack.c.h.s8.bf16 %v2090
        %v2187 = vunpack.c.h.s8.bf16 %v2091
        %v2188 = vunpack.c.h.s8.bf16 %v2092
        %v2189 = vunpack.c.h.s8.bf16 %v2093
        %v2190 = vunpack.c.l.s8.bf16 %v2094
        %v2191 = vunpack.c.l.s8.bf16 %v2095
        %v2192 = vunpack.c.l.s8.bf16 %v2096
        %v2193 = vunpack.c.l.s8.bf16 %v2097
        %v2194 = vunpack.c.h.s8.bf16 %v2094
        %v2195 = vunpack.c.h.s8.bf16 %v2095
        %v2196 = vunpack.c.h.s8.bf16 %v2096
        %v2197 = vunpack.c.h.s8.bf16 %v2097
        %v2198 = vunpack.c.l.s8.bf16 %v2098
        %v2199 = vunpack.c.l.s8.bf16 %v2099
        %v2200 = vunpack.c.l.s8.bf16 %v2100
        %v2201 = vunpack.c.l.s8.bf16 %v2101
        %v2202 = vunpack.c.h.s8.bf16 %v2098
        %v2203 = vunpack.c.h.s8.bf16 %v2099
        %v2204 = vunpack.c.h.s8.bf16 %v2100
        %v2205 = vunpack.c.h.s8.bf16 %v2101
        %v2206 = vunpack.c.l.s8.bf16 %v2102
        %v2207 = vunpack.c.l.s8.bf16 %v2103
        %v2208 = vunpack.c.l.s8.bf16 %v2104
        %v2209 = vunpack.c.l.s8.bf16 %v2105
        %v2210 = vunpack.c.h.s8.bf16 %v2102
        %v2211 = vunpack.c.h.s8.bf16 %v2103
        %v2212 = vunpack.c.h.s8.bf16 %v2104
        %v2213 = vunpack.c.h.s8.bf16 %v2105
        %v2214 = vunpack.c.l.s8.bf16 %v2106
        %v2215 = vunpack.c.l.s8.bf16 %v2107
        %v2216 = vunpack.c.l.s8.bf16 %v2108
        %v2217 = vunpack.c.l.s8.bf16 %v2109
        %v2218 = vunpack.c.h.s8.bf16 %v2106
        %v2219 = vunpack.c.h.s8.bf16 %v2107
        %v2220 = vunpack.c.h.s8.bf16 %v2108
        %v2221 = vunpack.c.h.s8.bf16 %v2109
        %v2222 = vunpack.c.l.s8.bf16 %v2110
        %v2223 = vunpack.c.l.s8.bf16 %v2111
        %v2224 = vunpack.c.l.s8.bf16 %v2112
        %v2225 = vunpack.c.l.s8.bf16 %v2113
        %v2226 = vunpack.c.h.s8.bf16 %v2110
        %v2227 = vunpack.c.h.s8.bf16 %v2111
        %v2228 = vunpack.c.h.s8.bf16 %v2112
        %v2229 = vunpack.c.h.s8.bf16 %v2113
        %v2230 = vunpack.c.l.s8.bf16 %v2114
        %v2231 = vunpack.c.l.s8.bf16 %v2115
        %v2232 = vunpack.c.l.s8.bf16 %v2116
        %v2233 = vunpack.c.l.s8.bf16 %v2117
        %v2234 = vunpack.c.h.s8.bf16 %v2114
        %v2235 = vunpack.c.h.s8.bf16 %v2115
        %v2236 = vunpack.c.h.s8.bf16 %v2116
        %v2237 = vunpack.c.h.s8.bf16 %v2117
        %v2238 = vunpack.c.l.s8.bf16 %v2118
        %v2239 = vunpack.c.l.s8.bf16 %v2119
        %v2240 = vunpack.c.l.s8.bf16 %v2120
        %v2241 = vunpack.c.l.s8.bf16 %v2121
        %v2242 = vunpack.c.h.s8.bf16 %v2118
        %v2243 = vunpack.c.h.s8.bf16 %v2119
        %v2244 = vunpack.c.h.s8.bf16 %v2120
        %v2245 = vunpack.c.h.s8.bf16 %v2121
        %v2246 = vunpack.c.l.s8.bf16 %v2122
        %v2247 = vunpack.c.l.s8.bf16 %v2123
        %v2248 = vunpack.c.l.s8.bf16 %v2124
        %v2249 = vunpack.c.l.s8.bf16 %v2125
        %v2250 = vunpack.c.h.s8.bf16 %v2122
        %v2251 = vunpack.c.h.s8.bf16 %v2123
        %v2252 = vunpack.c.h.s8.bf16 %v2124
        %v2253 = vunpack.c.h.s8.bf16 %v2125
        %v2254 = vpack.c.bf16 %v2058, %v2058
        %v2255 = vpack.c.bf16 %v2059, %v2059
        %v2256 = vpack.c.bf16 %v2060, %v2060
        %v2257 = vpack.c.bf16 %v2061, %v2061
        %2258 = vmatprep.subr.bf16.mxu0 %v2127
        %2259 = vmatpush1.bf16.msra.mxu0 %v2126
        %2260 = vmatprep.subr.bf16.mxu0 %v2131
        %2261 = vmatpush1.bf16.msra.mxu0 %v2130
        %2262 = vmatprep.subr.bf16.mxu0 %v2135
        %2263 = vmatpush1.bf16.msra.mxu0 %v2134
        %2264 = vmatprep.subr.bf16.mxu0 %v2139
        %2265 = vmatpush1.bf16.msra.mxu0 %v2138
        %2266 = vmatprep.subr.bf16.mxu0 %v2143
        %2267 = vmatpush1.bf16.msra.mxu0 %v2142
        %2268 = vmatprep.subr.bf16.mxu0 %v2147
        %2269 = vmatpush1.bf16.msra.mxu0 %v2146
        %2270 = vmatprep.subr.bf16.mxu0 %v2151
        %2271 = vmatpush1.bf16.msra.mxu0 %v2150
        %2272 = vmatprep.subr.bf16.mxu0 %v2155
        %2273 = vmatpush1.bf16.msra.mxu0 %v2154
        %2274 = vmatprep.subr.bf16.mxu0 %v2159
        %2275 = vmatpush1.bf16.msra.mxu0 %v2158
        %2276 = vmatprep.subr.bf16.mxu0 %v2163
        %2277 = vmatpush1.bf16.msra.mxu0 %v2162
        %2278 = vmatprep.subr.bf16.mxu0 %v2167
        %2279 = vmatpush1.bf16.msra.mxu0 %v2166
        %2280 = vmatprep.subr.bf16.mxu0 %v2171
        %2281 = vmatpush1.bf16.msra.mxu0 %v2170
        %2282 = vmatprep.subr.bf16.mxu0 %v2175
        %2283 = vmatpush1.bf16.msra.mxu0 %v2174
        %2284 = vmatprep.subr.bf16.mxu0 %v2179
        %2285 = vmatpush1.bf16.msra.mxu0 %v2178
        %2286 = vmatprep.subr.bf16.mxu0 %v2183
        %2287 = vmatpush1.bf16.msra.mxu0 %v2182
        %2288 = vmatprep.subr.bf16.mxu0 %v2187
        %2289 = vmatpush1.bf16.msra.mxu0 %v2186
        %2290 = vmatprep.mubr.bf16.mxu0 %v2255
        %2291 = vmatmul.mubr.bf16.gmra.mrb[0].mxu0 %v2254
        %v2292 = vpop.f32.mrb[0].mxu0
        %v2293 = vadd.f32 0.0, %v2292
        %v2294 = vpop.f32.mrb[0].mxu0
        %v2295 = vadd.f32 0.0, %v2294
        %v2296 = vpop.f32.mrb[0].mxu0
        %v2297 = vpop.f32.mrb[0].mxu0
        %2298 = vdwg.mxu0
        %2299 = vmatprep.subr.bf16.mxu0 %v2191
        %2300 = vmatpush1.bf16.msra.mxu0 %v2190
        %2301 = vmatprep.subr.bf16.mxu0 %v2195
        %2302 = vmatpush1.bf16.msra.mxu0 %v2194
        %2303 = vmatprep.subr.bf16.mxu0 %v2199
        %2304 = vmatpush1.bf16.msra.mxu0 %v2198
        %2305 = vmatprep.subr.bf16.mxu0 %v2203
        %2306 = vmatpush1.bf16.msra.mxu0 %v2202
        %2307 = vmatprep.subr.bf16.mxu0 %v2207
        %2308 = vmatpush1.bf16.msra.mxu0 %v2206
        %2309 = vmatprep.subr.bf16.mxu0 %v2211
        %2310 = vmatpush1.bf16.msra.mxu0 %v2210
        %2311 = vmatprep.subr.bf16.mxu0 %v2215
        %2312 = vmatpush1.bf16.msra.mxu0 %v2214
        %2313 = vmatprep.subr.bf16.mxu0 %v2219
        %2314 = vmatpush1.bf16.msra.mxu0 %v2218
        %2315 = vmatprep.subr.bf16.mxu0 %v2223
        %2316 = vmatpush1.bf16.msra.mxu0 %v2222
        %2317 = vmatprep.subr.bf16.mxu0 %v2227
        %2318 = vmatpush1.bf16.msra.mxu0 %v2226
        %2319 = vmatprep.subr.bf16.mxu0 %v2231
        %2320 = vmatpush1.bf16.msra.mxu0 %v2230
        %2321 = vmatprep.subr.bf16.mxu0 %v2235
        %2322 = vmatpush1.bf16.msra.mxu0 %v2234
        %2323 = vmatprep.subr.bf16.mxu0 %v2239
        %2324 = vmatpush1.bf16.msra.mxu0 %v2238
        %2325 = vmatprep.subr.bf16.mxu0 %v2243
        %2326 = vmatpush1.bf16.msra.mxu0 %v2242
        %2327 = vmatprep.subr.bf16.mxu0 %v2247
        %2328 = vmatpush1.bf16.msra.mxu0 %v2246
        %2329 = vmatprep.subr.bf16.mxu0 %v2251
        %2330 = vmatpush1.bf16.msra.mxu0 %v2250
        %2331 = vmatprep.mubr.bf16.mxu0 %v2257
        %2332 = vmatmul.mubr.bf16.gmra.mrb[0].mxu0 %v2256
        %v2333 = vpop.f32.mrb[0].mxu0
        %v2334 = vadd.f32 %v2293, %v2333
        %v2335 = vpop.f32.mrb[0].mxu0
        %v2336 = vadd.f32 %v2295, %v2335
        %v2337 = vpop.f32.mrb[0].mxu0
        %v2338 = vpop.f32.mrb[0].mxu0
        %2339 = vdwg.mxu0
        %2340 = vmatprep.subr.bf16.mxu0 %v2129
        %2341 = vmatpush1.bf16.msra.mxu0 %v2128
        %2342 = vmatprep.subr.bf16.mxu0 %v2133
        %2343 = vmatpush1.bf16.msra.mxu0 %v2132
        %2344 = vmatprep.subr.bf16.mxu0 %v2137
        %2345 = vmatpush1.bf16.msra.mxu0 %v2136
        %2346 = vmatprep.subr.bf16.mxu0 %v2141
        %2347 = vmatpush1.bf16.msra.mxu0 %v2140
        %2348 = vmatprep.subr.bf16.mxu0 %v2145
        %2349 = vmatpush1.bf16.msra.mxu0 %v2144
        %2350 = vmatprep.subr.bf16.mxu0 %v2149
        %2351 = vmatpush1.bf16.msra.mxu0 %v2148
        %2352 = vmatprep.subr.bf16.mxu0 %v2153
        %2353 = vmatpush1.bf16.msra.mxu0 %v2152
        %2354 = vmatprep.subr.bf16.mxu0 %v2157
        %2355 = vmatpush1.bf16.msra.mxu0 %v2156
        %2356 = vmatprep.subr.bf16.mxu0 %v2161
        %2357 = vmatpush1.bf16.msra.mxu0 %v2160
        %2358 = vmatprep.subr.bf16.mxu0 %v2165
        %2359 = vmatpush1.bf16.msra.mxu0 %v2164
        %2360 = vmatprep.subr.bf16.mxu0 %v2169
        %2361 = vmatpush1.bf16.msra.mxu0 %v2168
        %2362 = vmatprep.subr.bf16.mxu0 %v2173
        %2363 = vmatpush1.bf16.msra.mxu0 %v2172
        %2364 = vmatprep.subr.bf16.mxu0 %v2177
        %2365 = vmatpush1.bf16.msra.mxu0 %v2176
        %2366 = vmatprep.subr.bf16.mxu0 %v2181
        %2367 = vmatpush1.bf16.msra.mxu0 %v2180
        %2368 = vmatprep.subr.bf16.mxu0 %v2185
        %2369 = vmatpush1.bf16.msra.mxu0 %v2184
        %2370 = vmatprep.subr.bf16.mxu0 %v2189
        %2371 = vmatpush1.bf16.msra.mxu0 %v2188
        %2372 = vmatprep.mubr.bf16.mxu0 %v2255
        %2373 = vmatmul.mubr.bf16.gmra.mrb[0].mxu0 %v2254
        %v2374 = vpop.f32.mrb[0].mxu0
        %v2375 = vadd.f32 0.0, %v2374
        %v2376 = vpop.f32.mrb[0].mxu0
        %v2377 = vadd.f32 0.0, %v2376
        %v2378 = vpop.f32.mrb[0].mxu0
        %v2379 = vpop.f32.mrb[0].mxu0
        %2380 = vdwg.mxu0
        %2381 = vmatprep.subr.bf16.mxu0 %v2193
        %2382 = vmatpush1.bf16.msra.mxu0 %v2192
        %2383 = vmatprep.subr.bf16.mxu0 %v2197
        %2384 = vmatpush1.bf16.msra.mxu0 %v2196
        %2385 = vmatprep.subr.bf16.mxu0 %v2201
        %2386 = vmatpush1.bf16.msra.mxu0 %v2200
        %2387 = vmatprep.subr.bf16.mxu0 %v2205
        %2388 = vmatpush1.bf16.msra.mxu0 %v2204
        %2389 = vmatprep.subr.bf16.mxu0 %v2209
        %2390 = vmatpush1.bf16.msra.mxu0 %v2208
        %2391 = vmatprep.subr.bf16.mxu0 %v2213
        %2392 = vmatpush1.bf16.msra.mxu0 %v2212
        %2393 = vmatprep.subr.bf16.mxu0 %v2217
        %2394 = vmatpush1.bf16.msra.mxu0 %v2216
        %2395 = vmatprep.subr.bf16.mxu0 %v2221
        %2396 = vmatpush1.bf16.msra.mxu0 %v2220
        %2397 = vmatprep.subr.bf16.mxu0 %v2225
        %2398 = vmatpush1.bf16.msra.mxu0 %v2224
        %2399 = vmatprep.subr.bf16.mxu0 %v2229
        %2400 = vmatpush1.bf16.msra.mxu0 %v2228
        %2401 = vmatprep.subr.bf16.mxu0 %v2233
        %2402 = vmatpush1.bf16.msra.mxu0 %v2232
        %2403 = vmatprep.subr.bf16.mxu0 %v2237
        %2404 = vmatpush1.bf16.msra.mxu0 %v2236
        %2405 = vmatprep.subr.bf16.mxu0 %v2241
        %2406 = vmatpush1.bf16.msra.mxu0 %v2240
        %2407 = vmatprep.subr.bf16.mxu0 %v2245
        %2408 = vmatpush1.bf16.msra.mxu0 %v2244
        %2409 = vmatprep.subr.bf16.mxu0 %v2249
        %2410 = vmatpush1.bf16.msra.mxu0 %v2248
        %2411 = vmatprep.subr.bf16.mxu0 %v2253
        %2412 = vmatpush1.bf16.msra.mxu0 %v2252
        %2413 = vmatprep.mubr.bf16.mxu0 %v2257
        %2414 = vmatmul.mubr.bf16.gmra.mrb[0].mxu0 %v2256
        %v2415 = vpop.f32.mrb[0].mxu0
        %v2416 = vadd.f32 %v2375, %v2415
        %v2417 = vpop.f32.mrb[0].mxu0
        %v2418 = vadd.f32 %v2377, %v2417
        %v2419 = vpop.f32.mrb[0].mxu0
        %v2420 = vpop.f32.mrb[0].mxu0
        %2421 = vdwg.mxu0
        %v2422 = vld [vmem:[#allocation11] sm:$0xf]
        %v2424 = vlaneseq
        %v2425 = vshrl.u32 %v2424, 7
        %v2426 = vsub.s32 0, %v2425
        %v2427 = vrot.slane %v2422, %v2426
        %v2428 = vlaneseq
        %v2429 = vshrl.u32 %v2428, 7
        %v2430 = vsub.s32 1, %v2429
        %v2431 = vrot.slane %v2422, %v2430
        %v2432 = vlaneseq
        %v2433 = vshrl.u32 %v2432, 7
        %v2434 = vsub.s32 2, %v2433
        %v2435 = vrot.slane %v2422, %v2434
        %v2436 = vlaneseq
        %v2437 = vshrl.u32 %v2436, 7
        %v2438 = vsub.s32 3, %v2437
        %v2439 = vrot.slane %v2422, %v2438
        %v2444 = vmul.f32 %v2334, %v2427
        %v2445 = vmul.f32 %v2336, %v2431
        %v2446 = vmul.f32 %v2416, %v2435
        %v2447 = vmul.f32 %v2418, %v2439
        %v2448 = vld [vmem:[%s430] sm:$0xff]
        %v2449 = vld [vmem:[%s430 + $0x8] sm:$0xff]
        %v2450 = vld [vmem:[%s430 + $0x10] sm:$0xff]
        %v2451 = vld [vmem:[%s430 + $0x18] sm:$0xff]
        %v2452 = vadd.f32 %v2448, %v2444
        %v2453 = vadd.f32 %v2449, %v2445
        %v2454 = vadd.f32 %v2450, %v2446
        %v2455 = vadd.f32 %v2451, %v2447
        %2456 = vst [vmem:[%s430] sm:$0xff] %v2452
        %2457 = vst [vmem:[%s430 + $0x8] sm:$0xff] %v2453
        %2458 = vst [vmem:[%s430 + $0x10] sm:$0xff] %v2454
        %2459 = vst [vmem:[%s430 + $0x18] sm:$0xff] %v2455
        %s2460 = sand.u32 %s202, 1
        %s2461 = scalar_lea.sflag [#allocation4], %s2460
        %s2462 = sand.u32 %s202, 1
        %s2463 = smul.addr %s2462, 32
        %s2464 = scalar_lea.vmem [#allocation13], %s2463
        // Predicated region
        $region73: #{tpu_custom_call.1} parent=43 // pred_check
          %p2465 = pneg %p212
        $region74: #{tpu_custom_call.1} parent=43 // pred_check_branch
          %2467 = sbr.rel (%p2465) target = $region76
        $region75: #{tpu_custom_call.1} parent=43 // pred_region
          %s2469 = ssub.s32 512, 512
          %2470 = vsyncadd %s2461, %s2469
          %s2471 = smul.addr %s32, 4
          %s2472 = smul.addr %s2471, 128
          %s2473 = scalar_lea.hbm %s6, %s2472
          %s2475 = sshll.u32 %s2464, 4
          %s2476 = int_to_ptr.vmem [resolvable:$true] %s2475
          %2478 = dma.vmem_to_hbm [thread:$0]  %s2476, 512, %s2473, %s2461
        $region76: #{tpu_custom_call.1} parent=43 // pred_fallthru
          _
      $region44: #{tpu_custom_call.1} parent=5 // pred_fallthru
        _
      %p2479 = scmp.le.s32.totalorder 2, %s23
      // Predicated region
      $region77: #{tpu_custom_call.1} parent=5 // pred_check
        %p2480 = pneg %p2479
      $region78: #{tpu_custom_call.1} parent=5 // pred_check_branch
        %2482 = sbr.rel (%p2480) target = $region80
      $region79: #{tpu_custom_call.1} parent=5 // pred_region
        %s2483 = ssub.s32 %s23, 2
        // Predicated region
        $region81: #{tpu_custom_call.1} parent=79 // pred_check
          %p2484 = pneg %p218
        $region82: #{tpu_custom_call.1} parent=79 // pred_check_branch
          %2486 = sbr.rel (%p2484) target = $region84
        $region83: #{tpu_custom_call.1} parent=79 // pred_region
          %s2487 = sand.u32 %s203, 1
          %s2488 = scalar_lea.sflag [#allocation4], %s2487
          %s2489 = sand.u32 %s203, 1
          %s2490 = smul.addr %s2489, 32
          %s2491 = scalar_lea.vmem [#allocation13], %s2490
          %2492 = dma.done %s2488, 512
        $region84: #{tpu_custom_call.1} parent=79 // pred_fallthru
          _
      $region80: #{tpu_custom_call.1} parent=5 // pred_fallthru
        _
    $region6: #{tpu_custom_call.1} parent=1 // loop_footer
      %s27 = sadd.s32 1, %s23
    $region7: #{tpu_custom_call.1} parent=1 // loop_footer_branch
      %22 = sbr.rel target = $region3
    $region8: #{tpu_custom_call.1} parent=1 // loop_exit
      _
    %2493 = vsyncpa [#allocation3], 1
    %s2494 = scalar_lea.sflag [#allocation3], 1
    %2495 = vsyncpa %s2494, 1
    %2496 = vsyncpa [#allocation6], 1
    %s2497 = scalar_lea.sflag [#allocation6], 1
    %2498 = vsyncpa %s2497, 1
    %2499 = vsyncpa [#allocation9], 1
    %s2500 = scalar_lea.sflag [#allocation9], 1
    %2501 = vsyncpa %s2500, 1
    %2502 = vsyncpa [#allocation12], 1
    %2503 = vsyncpa [#allocation4], 1
    %s2504 = scalar_lea.sflag [#allocation4], 1
    %2505 = vsyncpa %s2504, 1

</llo_original>
